<compile_context>
chip_gen: v7x
topology: tpu7x:2x2x1
jax: 0.10.0
libtpu: 0.0.40
codegen_flags: <defaults>
</compile_context>

<pallas_src>
import functools

import jax
import jax.numpy as jnp
from jax.experimental import pallas as pl
from jax.experimental.pallas import tpu as pltpu

EPS = 1e-5


# ------------------------------ fused Pallas kernel -------------------------------- #

def _make_block_kernel(*, stride, row_tile, Wo, Cin, Cout):
    """Fused BasicBlock kernel. One grid step = `row_tile` output rows of one image."""
    nx = 1 if stride == 1 else 4
    TH = row_tile

    def kernel(*refs):
        x_refs = refs[:nx]
        w1_ref, b1_ref, w2_ref, b2_ref, out_ref, y1p_ref = refs[nx:]

        t = pl.program_id(1)
        r0 = t * TH                                   # first output row of this tile

        def conv1_tap(kh, kw):
            # input window feeding y1 rows [r0-1, r0+TH+1) (incl. the conv2 halo rows)
            if stride == 1:
                return x_refs[0][0, pl.ds(r0 + kh, TH + 2), kw:kw + Wo, :]
            ph = x_refs[(kh % 2) * 2 + (kw % 2)]      # parity phase of the padded input
            return ph[0, pl.ds(r0 + kh // 2, TH + 2), kw // 2:kw // 2 + Wo, :]

        def shortcut_tap():
            # original input decimated by `stride`, rows [r0, r0+TH)
            if stride == 1:
                return x_refs[0][0, pl.ds(r0 + 2, TH), 1:1 + Wo, :]
            return x_refs[3][0, pl.ds(r0 + 1, TH), 0:Wo, :]

        # ---- conv1 (3x3, stride) + folded BN1 + ReLU: ONE matmul, K = 9*Cin -------- #
        patch1 = jnp.concatenate(
            [conv1_tap(kh, kw) for kh in range(3) for kw in range(3)], axis=-1)
        y1 = jnp.dot(patch1.reshape((TH + 2) * Wo, 9 * Cin), w1_ref[...],
                     preferred_element_type=jnp.float32)
        y1 = jnp.maximum(y1 + b1_ref[...], 0.0)

        # stage y1 (halo rows + zero border columns) for conv2's taps; everything conv2
        # reads below is rewritten in this same step (no scratch-persistence reliance).
        y1p_ref[:, 1:Wo + 1, :] = y1.reshape(TH + 2, Wo, Cout).astype(y1p_ref.dtype)
        y1p_ref[:, 0, :] = jnp.zeros((TH + 2, Cout), y1p_ref.dtype)
        y1p_ref[:, Wo + 1, :] = jnp.zeros((TH + 2, Cout), y1p_ref.dtype)

        @pl.when(t == 0)                              # top image border: halo row is 0
        def _():
            y1p_ref[0, :, :] = jnp.zeros((Wo + 2, Cout), y1p_ref.dtype)

        @pl.when(t == pl.num_programs(1) - 1)         # bottom image border
        def _():
            y1p_ref[TH + 1, :, :] = jnp.zeros((Wo + 2, Cout), y1p_ref.dtype)

        # ---- conv2 + BN2 + shortcut + final ReLU: ONE matmul, K = 9*Cout + Cin ----- #
        pieces = [y1p_ref[kh:kh + TH, kw:kw + Wo, :]
                  for kh in range(3) for kw in range(3)]
        pieces.append(shortcut_tap())                 # shortcut folded into w2's K dim
        patch2 = jnp.concatenate(pieces, axis=-1).reshape(TH * Wo, 9 * Cout + Cin)
        acc = jnp.dot(patch2, w2_ref[...], preferred_element_type=jnp.float32)
        acc = jnp.maximum(acc + b2_ref[...], 0.0)
        out_ref[...] = acc.reshape(1, TH, Wo, Cout).astype(out_ref.dtype)

    return kernel


# ------------------------------------ wrapper --------------------------------------- #

def _fold_conv_bn(w, bn, dtype):
    """Fold BN scale/shift into conv weights.
    w: [Cout, Cin, kh, kw] -> ([kh*kw*Cin, Cout] scaled weights, [1, Cout] f32 bias)."""
    cout, cin, kh, kw = w.shape
    scale = bn["gamma"] / jnp.sqrt(bn["var"] + EPS)
    bias = bn["beta"] - bn["mean"] * scale
    wf = (jnp.transpose(w, (2, 3, 1, 0)) * scale).reshape(kh * kw * cin, cout)
    return wf.astype(dtype), bias.reshape(1, cout).astype(jnp.float32)


def _pick_row_tile(Ho, Wo, Cin, Cout):
    """Largest divisor of Ho whose f32 conv2 patch tile stays <= ~2 MiB."""
    for th in range(Ho, 0, -1):
        if Ho % th == 0 and th * Wo * (9 * Cout + Cin) * 4 <= 2 * 1024 * 1024:
            return th
    return 1


def _vmem_limit_bytes():
    # raise the scoped-VMEM ceiling above the 32 MiB default where the chip allows it
    # (128 MiB physical on v5e/v6e, 64 MiB on v7x)
    try:
        cap = int(pltpu.get_tpu_info().vmem_capacity_bytes)
        return min(cap * 3 // 4, 96 * 1024 * 1024)
    except Exception:
        return 64 * 1024 * 1024


@functools.partial(jax.jit, static_argnames=("stride", "compute_dtype", "row_tile"))
def basic_block_forward(x_nchw, params, *, stride, compute_dtype=jnp.bfloat16,
                        row_tile=None):
    """Pallas implementation of BasicBlock.forward (inference). Input/output are NCHW."""
    N, Cin, H, W = x_nchw.shape
    Cout = params["w1"].shape[0]
    projection = "ws" in params
    assert stride in (1, 2), "only ResNet strides 1 / 2 are supported"
    if stride == 2:
        assert H % 2 == 0 and W % 2 == 0
    if not projection:
        assert stride == 1 and Cin == Cout, "identity shortcut needs stride=1, Cin=Cout"
    Ho, Wo = H // stride, W // stride

    TH = row_tile if row_tile is not None else _pick_row_tile(Ho, Wo, Cin, Cout)
    assert Ho % TH == 0, (Ho, TH)
    T = Ho // TH

    # ---- inputs: NHWC, spatially zero-padded, channels left UNPADDED --------------- #
    x = jnp.transpose(x_nchw, (0, 2, 3, 1)).astype(compute_dtype)
    if stride == 1:
        # 2 pad rows top/bottom so each row tile can also compute its y1 halo rows
        x_in = [jnp.pad(x, ((0, 0), (2, 2), (1, 1), (0, 0)))]
        x_specs = [pl.BlockSpec((1, Ho + 4, Wo + 2, Cin), lambda n, t: (n, 0, 0, 0))]
    else:
        # even/odd phase split: every stride-2 tap is a contiguous in-kernel slice;
        # 1 extra pad row top/bottom per phase for the halo rows.
        xp = jnp.pad(x, ((0, 0), (1, 1), (1, 1), (0, 0)))
        x_in = [jnp.pad(xp[:, a::2, b::2, :], ((0, 0), (1, 1), (0, 0), (0, 0)))
                for a in (0, 1) for b in (0, 1)]
        x_specs = [pl.BlockSpec((1, Ho + 3, Wo + 1, Cin), lambda n, t: (n, 0, 0, 0))
                   for _ in range(4)]

    # ---- weights: BN folded in; shortcut folded into conv2's K dimension ----------- #
    w1, b1 = _fold_conv_bn(params["w1"], params["bn1"], compute_dtype)
    w2, b2 = _fold_conv_bn(params["w2"], params["bn2"], compute_dtype)
    if projection:
        wsc, bsc = _fold_conv_bn(params["ws"], params["bns"], compute_dtype)
        b2 = b2 + bsc
    else:
        wsc = jnp.eye(Cout, dtype=compute_dtype)       # identity shortcut as eye-matmul
    w2 = jnp.concatenate([w2, wsc], axis=0)            # [9*Cout + Cin, Cout]

    args = x_in + [w1, b1, w2, b2]
    in_specs = x_specs + [
        pl.BlockSpec((9 * Cin, Cout), lambda n, t: (0, 0)),
        pl.BlockSpec((1, Cout), lambda n, t: (0, 0)),
        pl.BlockSpec((9 * Cout + Cin, Cout), lambda n, t: (0, 0)),
        pl.BlockSpec((1, Cout), lambda n, t: (0, 0)),
    ]

    kernel = _make_block_kernel(stride=stride, row_tile=TH, Wo=Wo, Cin=Cin, Cout=Cout)
    itemsize = jnp.dtype(compute_dtype).itemsize
    flops = 2 * N * Ho * Wo * Cout * (9 * Cin + 9 * Cout + Cin)
    bytes_accessed = (sum(int(a.size) * a.dtype.itemsize for a in args)
                      + N * Ho * Wo * Cout * itemsize)

    out = pl.pallas_call(
        kernel,
        grid=(N, T),
        in_specs=in_specs,
        out_specs=pl.BlockSpec((1, TH, Wo, Cout), lambda n, t: (n, t, 0, 0)),
        out_shape=jax.ShapeDtypeStruct((N, Ho, Wo, Cout), compute_dtype),
        scratch_shapes=[pltpu.VMEM((TH + 2, Wo + 2, Cout), compute_dtype)],
        compiler_params=pltpu.CompilerParams(
            dimension_semantics=("parallel", "parallel"),
            vmem_limit_bytes=_vmem_limit_bytes()),
        cost_estimate=pl.CostEstimate(flops=flops, transcendentals=0,
                                      bytes_accessed=bytes_accessed),
    )(*args)

    return jnp.transpose(out, (0, 3, 1, 2)).astype(x_nchw.dtype)


# ------------------------------ pure-JAX reference ---------------------------------- #

def _ref_forward(x, params, stride):
    def conv(x, w, s, pad):
        return jax.lax.conv_general_dilated(
            x, w, (s, s), [(pad, pad), (pad, pad)],
            dimension_numbers=("NCHW", "OIHW", "NCHW"))

    def bn(x, p):
        scale = p["gamma"] / jnp.sqrt(p["var"] + EPS)
        bias = p["beta"] - p["mean"] * scale
        return x * scale[None, :, None, None] + bias[None, :, None, None]

    y = jax.nn.relu(bn(conv(x, params["w1"], stride, 1), params["bn1"]))
    y = bn(conv(y, params["w2"], 1, 1), params["bn2"])
    sc = bn(conv(x, params["ws"], stride, 0), params["bns"]) if "ws" in params else x
    return jax.nn.relu(y + sc)


# -------------------------------------- main ---------------------------------------- #

def _make_bn_params(key, c):
    k1, k2, k3, k4 = jax.random.split(key, 4)
    return {
        "gamma": jax.random.uniform(k1, (c,), jnp.float32, 0.5, 1.5),
        "beta": 0.1 * jax.random.normal(k2, (c,), jnp.float32),
        "mean": 0.1 * jax.random.normal(k3, (c,), jnp.float32),
        "var": jax.random.uniform(k4, (c,), jnp.float32, 0.5, 1.5),
    }


def _make_example(key, N, Cin, Cout, H, W, stride):
    keys = jax.random.split(key, 8)
    params = {
        "w1": 0.1 * jax.random.normal(keys[0], (Cout, Cin, 3, 3), jnp.float32),
        "bn1": _make_bn_params(keys[1], Cout),
        "w2": 0.1 * jax.random.normal(keys[2], (Cout, Cout, 3, 3), jnp.float32),
        "bn2": _make_bn_params(keys[3], Cout),
    }
    if stride != 1 or Cin != Cout:
        params["ws"] = 0.1 * jax.random.normal(keys[4], (Cout, Cin, 1, 1), jnp.float32)
        params["bns"] = _make_bn_params(keys[5], Cout)
    x = jax.random.normal(keys[6], (N, Cin, H, W), jnp.float32)
    return params, x


if __name__ == "__main__":
    key = jax.random.PRNGKey(0)
    configs = [
        # (cfg, row_tile) — explicit row_tile also exercises the multi-tile (T>1) path
        (dict(N=2, Cin=8, Cout=8, H=16, W=16, stride=1), 8),     # identity shortcut, T=2
        (dict(N=2, Cin=4, Cout=8, H=16, W=16, stride=1), None),  # projection, auto tile
        (dict(N=2, Cin=4, Cout=8, H=32, W=32, stride=2), 4),     # projection + stride 2
    ]

    # correctness checks in f32 compute mode (tight tolerance)
    for i, (cfg, rt) in enumerate(configs):
        key, sub = jax.random.split(key)
        params, x = _make_example(sub, **cfg)
        ref = jax.block_until_ready(_ref_forward(x, params, cfg["stride"]))
        out = jax.block_until_ready(
            basic_block_forward(x, params, stride=cfg["stride"],
                                compute_dtype=jnp.float32, row_tile=rt))
        assert out.shape == ref.shape, (out.shape, ref.shape)
        err = float(jnp.max(jnp.abs(out - ref)))
        assert jnp.allclose(out, ref, atol=5e-3, rtol=5e-3), (i, err)

    # bf16 fast path (intended production config) on the stride-2 projection block
    cfg, rt = configs[-1]
    params, x = _make_example(jax.random.PRNGKey(1), **cfg)
    ref = jax.block_until_ready(_ref_forward(x, params, cfg["stride"]))
    out = jax.block_until_ready(
        basic_block_forward(x, params, stride=cfg["stride"],
                            compute_dtype=jnp.bfloat16, row_tile=rt))
    err = float(jnp.max(jnp.abs(out - ref)))
    assert jnp.allclose(out, ref, atol=1e-1, rtol=1e-1), err

    print("KERNEL_OK")
</pallas_src>

<mosaic_0001>
module attributes {stable_mosaic.version = 11 : i64} {
  func.func @kernel(%arg0: i32, %arg1: i32, %arg2: memref<1x20x18x8xf32, #tpu.memory_space<vmem>>, %arg3: memref<72x8xf32, #tpu.memory_space<vmem>>, %arg4: memref<1x8xf32, #tpu.memory_space<vmem>>, %arg5: memref<80x8xf32, #tpu.memory_space<vmem>>, %arg6: memref<1x8xf32, #tpu.memory_space<vmem>>, %arg7: memref<1x8x16x8xf32, #tpu.memory_space<vmem>>, %arg8: memref<10x18x8xf32, #tpu.memory_space<vmem>>) attributes {dimension_semantics = [#tpu.dimension_semantics<parallel>, #tpu.dimension_semantics<parallel>], iteration_bounds = array<i64: 2, 2>, scalar_prefetch = 0 : i64, scratch_operands = 1 : i64, tpu.core_type = #tpu.core_type<tc>, window_params = [{transform_indices = @transform_0, window_bounds = array<i64: 1, 20, 18, 8>}, {pipeline_mode = #tpu.pipeline_mode<synchronous>, transform_indices = @transform_1, window_bounds = array<i64: 72, 8>}, {pipeline_mode = #tpu.pipeline_mode<synchronous>, transform_indices = @transform_2, window_bounds = array<i64: 1, 8>}, {pipeline_mode = #tpu.pipeline_mode<synchronous>, transform_indices = @transform_3, window_bounds = array<i64: 80, 8>}, {pipeline_mode = #tpu.pipeline_mode<synchronous>, transform_indices = @transform_4, window_bounds = array<i64: 1, 8>}, {transform_indices = @transform_5, window_bounds = array<i64: 1, 8, 16, 8>}]} {
    %c8_i32 = arith.constant 8 : i32
    %0 = arith.muli %arg1, %c8_i32 : i32
    %c0_i32 = arith.constant 0 : i32
    %1 = arith.addi %0, %c0_i32 : i32
    %c0 = arith.constant 0 : index
    %2 = arith.index_cast %1 : i32 to index
    %c0_0 = arith.constant 0 : index
    %c0_1 = arith.constant 0 : index
    %3 = vector.load %arg2[%c0, %2, %c0_0, %c0_1] : memref<1x20x18x8xf32, #tpu.memory_space<vmem>>, vector<1x10x16x8xf32>
    %4 = vector.shape_cast %3 : vector<1x10x16x8xf32> to vector<10x16x8xf32>
    %c0_i32_2 = arith.constant 0 : i32
    %5 = arith.addi %0, %c0_i32_2 : i32
    %c0_3 = arith.constant 0 : index
    %6 = arith.index_cast %5 : i32 to index
    %c1 = arith.constant 1 : index
    %c0_4 = arith.constant 0 : index
    %7 = vector.load %arg2[%c0_3, %6, %c1, %c0_4] : memref<1x20x18x8xf32, #tpu.memory_space<vmem>>, vector<1x10x16x8xf32>
    %8 = vector.shape_cast %7 : vector<1x10x16x8xf32> to vector<10x16x8xf32>
    %c0_i32_5 = arith.constant 0 : i32
    %9 = arith.addi %0, %c0_i32_5 : i32
    %c0_6 = arith.constant 0 : index
    %10 = arith.index_cast %9 : i32 to index
    %c2 = arith.constant 2 : index
    %c0_7 = arith.constant 0 : index
    %11 = vector.load %arg2[%c0_6, %10, %c2, %c0_7] : memref<1x20x18x8xf32, #tpu.memory_space<vmem>>, vector<1x10x16x8xf32>
    %12 = vector.shape_cast %11 : vector<1x10x16x8xf32> to vector<10x16x8xf32>
    %c1_i32 = arith.constant 1 : i32
    %13 = arith.addi %0, %c1_i32 : i32
    %c0_8 = arith.constant 0 : index
    %14 = arith.index_cast %13 : i32 to index
    %c0_9 = arith.constant 0 : index
    %c0_10 = arith.constant 0 : index
    %15 = vector.load %arg2[%c0_8, %14, %c0_9, %c0_10] : memref<1x20x18x8xf32, #tpu.memory_space<vmem>>, vector<1x10x16x8xf32>
    %16 = vector.shape_cast %15 : vector<1x10x16x8xf32> to vector<10x16x8xf32>
    %c1_i32_11 = arith.constant 1 : i32
    %17 = arith.addi %0, %c1_i32_11 : i32
    %c0_12 = arith.constant 0 : index
    %18 = arith.index_cast %17 : i32 to index
    %c1_13 = arith.constant 1 : index
    %c0_14 = arith.constant 0 : index
    %19 = vector.load %arg2[%c0_12, %18, %c1_13, %c0_14] : memref<1x20x18x8xf32, #tpu.memory_space<vmem>>, vector<1x10x16x8xf32>
    %20 = vector.shape_cast %19 : vector<1x10x16x8xf32> to vector<10x16x8xf32>
    %c1_i32_15 = arith.constant 1 : i32
    %21 = arith.addi %0, %c1_i32_15 : i32
    %c0_16 = arith.constant 0 : index
    %22 = arith.index_cast %21 : i32 to index
    %c2_17 = arith.constant 2 : index
    %c0_18 = arith.constant 0 : index
    %23 = vector.load %arg2[%c0_16, %22, %c2_17, %c0_18] : memref<1x20x18x8xf32, #tpu.memory_space<vmem>>, vector<1x10x16x8xf32>
    %24 = vector.shape_cast %23 : vector<1x10x16x8xf32> to vector<10x16x8xf32>
    %c2_i32 = arith.constant 2 : i32
    %25 = arith.addi %0, %c2_i32 : i32
    %c0_19 = arith.constant 0 : index
    %26 = arith.index_cast %25 : i32 to index
    %c0_20 = arith.constant 0 : index
    %c0_21 = arith.constant 0 : index
    %27 = vector.load %arg2[%c0_19, %26, %c0_20, %c0_21] : memref<1x20x18x8xf32, #tpu.memory_space<vmem>>, vector<1x10x16x8xf32>
    %28 = vector.shape_cast %27 : vector<1x10x16x8xf32> to vector<10x16x8xf32>
    %c2_i32_22 = arith.constant 2 : i32
    %29 = arith.addi %0, %c2_i32_22 : i32
    %c0_23 = arith.constant 0 : index
    %30 = arith.index_cast %29 : i32 to index
    %c1_24 = arith.constant 1 : index
    %c0_25 = arith.constant 0 : index
    %31 = vector.load %arg2[%c0_23, %30, %c1_24, %c0_25] : memref<1x20x18x8xf32, #tpu.memory_space<vmem>>, vector<1x10x16x8xf32>
    %32 = vector.shape_cast %31 : vector<1x10x16x8xf32> to vector<10x16x8xf32>
    %c2_i32_26 = arith.constant 2 : i32
    %33 = arith.addi %0, %c2_i32_26 : i32
    %c0_27 = arith.constant 0 : index
    %34 = arith.index_cast %33 : i32 to index
    %c2_28 = arith.constant 2 : index
    %c0_29 = arith.constant 0 : index
    %35 = vector.load %arg2[%c0_27, %34, %c2_28, %c0_29] : memref<1x20x18x8xf32, #tpu.memory_space<vmem>>, vector<1x10x16x8xf32>
    %36 = vector.shape_cast %35 : vector<1x10x16x8xf32> to vector<10x16x8xf32>
    %37 = tpu.concatenate %4, %8, %12, %16, %20, %24, %28, %32, %36 in 2 : vector<10x16x8xf32>, vector<10x16x8xf32>, vector<10x16x8xf32>, vector<10x16x8xf32>, vector<10x16x8xf32>, vector<10x16x8xf32>, vector<10x16x8xf32>, vector<10x16x8xf32>, vector<10x16x8xf32> -> vector<10x16x72xf32>
    %38 = vector.shape_cast %37 : vector<10x16x72xf32> to vector<160x72xf32>
    %c0_30 = arith.constant 0 : index
    %c0_31 = arith.constant 0 : index
    %39 = vector.load %arg3[%c0_30, %c0_31] : memref<72x8xf32, #tpu.memory_space<vmem>>, vector<72x8xf32>
    %cst = arith.constant dense<0.000000e+00> : vector<160x8xf32>
    %40 = tpu.matmul %38, %39, %cst {dimension_numbers = #tpu.dot_dimension_numbers<[1], [0], [0], [1], [0, 0, 1, 1], [], []>} : vector<160x72xf32>, vector<72x8xf32>, vector<160x8xf32> -> vector<160x8xf32>
    %c0_32 = arith.constant 0 : index
    %c0_33 = arith.constant 0 : index
    %41 = vector.load %arg4[%c0_32, %c0_33] : memref<1x8xf32, #tpu.memory_space<vmem>>, vector<1x8xf32>
    %42 = vector.broadcast %41 : vector<1x8xf32> to vector<160x8xf32>
    %43 = arith.addf %40, %42 : vector<160x8xf32>
    %cst_34 = arith.constant 0.000000e+00 : f32
    %44 = vector.broadcast %cst_34 : f32 to vector<160x8xf32>
    %45 = arith.maximumf %43, %44 : vector<160x8xf32>
    %46 = vector.shape_cast %45 : vector<160x8xf32> to vector<10x16x8xf32>
    %c0_35 = arith.constant 0 : index
    %c1_36 = arith.constant 1 : index
    %c0_37 = arith.constant 0 : index
    %47 = vector.load %arg8[%c0_35, %c1_36, %c0_37] : memref<10x18x8xf32, #tpu.memory_space<vmem>>, vector<10x16x8xf32>
    tpu.vector_store %arg8[%c0_35, %c1_36, %c0_37], %46 {strides = array<i32>} : memref<10x18x8xf32, #tpu.memory_space<vmem>>, vector<10x16x8xf32>,
    %cst_38 = arith.constant 0.000000e+00 : f32
    %48 = vector.broadcast %cst_38 : f32 to vector<10x8xf32>
    %c0_39 = arith.constant 0 : index
    %c0_40 = arith.constant 0 : index
    %c0_41 = arith.constant 0 : index
    %49 = vector.load %arg8[%c0_39, %c0_40, %c0_41] : memref<10x18x8xf32, #tpu.memory_space<vmem>>, vector<10x1x8xf32>
    %50 = vector.shape_cast %49 : vector<10x1x8xf32> to vector<10x8xf32>
    %51 = vector.shape_cast %48 : vector<10x8xf32> to vector<10x1x8xf32>
    tpu.vector_store %arg8[%c0_39, %c0_40, %c0_41], %51 {strides = array<i32>} : memref<10x18x8xf32, #tpu.memory_space<vmem>>, vector<10x1x8xf32>,
    %cst_42 = arith.constant 0.000000e+00 : f32
    %52 = vector.broadcast %cst_42 : f32 to vector<10x8xf32>
    %c0_43 = arith.constant 0 : index
    %c17 = arith.constant 17 : index
    %c0_44 = arith.constant 0 : index
    %53 = vector.load %arg8[%c0_43, %c17, %c0_44] : memref<10x18x8xf32, #tpu.memory_space<vmem>>, vector<10x1x8xf32>
    %54 = vector.shape_cast %53 : vector<10x1x8xf32> to vector<10x8xf32>
    %55 = vector.shape_cast %52 : vector<10x8xf32> to vector<10x1x8xf32>
    tpu.vector_store %arg8[%c0_43, %c17, %c0_44], %55 {strides = array<i32>} : memref<10x18x8xf32, #tpu.memory_space<vmem>>, vector<10x1x8xf32>,
    %c0_i32_45 = arith.constant 0 : i32
    %56 = arith.cmpi eq, %arg1, %c0_i32_45 : i32
    %57 = arith.extui %56 : i1 to i32
    %c0_i32_46 = arith.constant 0 : i32
    %58 = arith.cmpi ne, %57, %c0_i32_46 : i32
    scf.if %58 {
      %cst_90 = arith.constant 0.000000e+00 : f32
      %86 = vector.broadcast %cst_90 : f32 to vector<18x8xf32>
      %c0_91 = arith.constant 0 : index
      %c0_92 = arith.constant 0 : index
      %c0_93 = arith.constant 0 : index
      %87 = vector.load %arg8[%c0_91, %c0_92, %c0_93] : memref<10x18x8xf32, #tpu.memory_space<vmem>>, vector<1x18x8xf32>
      %88 = vector.shape_cast %87 : vector<1x18x8xf32> to vector<18x8xf32>
      %89 = vector.shape_cast %86 : vector<18x8xf32> to vector<1x18x8xf32>
      tpu.vector_store %arg8[%c0_91, %c0_92, %c0_93], %89 {strides = array<i32>} : memref<10x18x8xf32, #tpu.memory_space<vmem>>, vector<1x18x8xf32>,
    } else {
    }
    %c1_i32_47 = arith.constant 1 : i32
    %59 = arith.cmpi eq, %arg1, %c1_i32_47 : i32
    %60 = arith.extui %59 : i1 to i32
    %c0_i32_48 = arith.constant 0 : i32
    %61 = arith.cmpi ne, %60, %c0_i32_48 : i32
    scf.if %61 {
      %cst_90 = arith.constant 0.000000e+00 : f32
      %86 = vector.broadcast %cst_90 : f32 to vector<18x8xf32>
      %c9 = arith.constant 9 : index
      %c0_91 = arith.constant 0 : index
      %c0_92 = arith.constant 0 : index
      %87 = vector.load %arg8[%c9, %c0_91, %c0_92] : memref<10x18x8xf32, #tpu.memory_space<vmem>>, vector<1x18x8xf32>
      %88 = vector.shape_cast %87 : vector<1x18x8xf32> to vector<18x8xf32>
      %89 = vector.shape_cast %86 : vector<18x8xf32> to vector<1x18x8xf32>
      tpu.vector_store %arg8[%c9, %c0_91, %c0_92], %89 {strides = array<i32>} : memref<10x18x8xf32, #tpu.memory_space<vmem>>, vector<1x18x8xf32>,
    } else {
    }
    %c0_49 = arith.constant 0 : index
    %c0_50 = arith.constant 0 : index
    %c0_51 = arith.constant 0 : index
    %62 = vector.load %arg8[%c0_49, %c0_50, %c0_51] : memref<10x18x8xf32, #tpu.memory_space<vmem>>, vector<8x16x8xf32>
    %c0_52 = arith.constant 0 : index
    %c1_53 = arith.constant 1 : index
    %c0_54 = arith.constant 0 : index
    %63 = vector.load %arg8[%c0_52, %c1_53, %c0_54] : memref<10x18x8xf32, #tpu.memory_space<vmem>>, vector<8x16x8xf32>
    %c0_55 = arith.constant 0 : index
    %c2_56 = arith.constant 2 : index
    %c0_57 = arith.constant 0 : index
    %64 = vector.load %arg8[%c0_55, %c2_56, %c0_57] : memref<10x18x8xf32, #tpu.memory_space<vmem>>, vector<8x16x8xf32>
    %c1_58 = arith.constant 1 : index
    %c0_59 = arith.constant 0 : index
    %c0_60 = arith.constant 0 : index
    %65 = vector.load %arg8[%c1_58, %c0_59, %c0_60] : memref<10x18x8xf32, #tpu.memory_space<vmem>>, vector<8x16x8xf32>
    %c1_61 = arith.constant 1 : index
    %c1_62 = arith.constant 1 : index
    %c0_63 = arith.constant 0 : index
    %66 = vector.load %arg8[%c1_61, %c1_62, %c0_63] : memref<10x18x8xf32, #tpu.memory_space<vmem>>, vector<8x16x8xf32>
    %c1_64 = arith.constant 1 : index
    %c2_65 = arith.constant 2 : index
    %c0_66 = arith.constant 0 : index
    %67 = vector.load %arg8[%c1_64, %c2_65, %c0_66] : memref<10x18x8xf32, #tpu.memory_space<vmem>>, vector<8x16x8xf32>
    %c2_67 = arith.constant 2 : index
    %c0_68 = arith.constant 0 : index
    %c0_69 = arith.constant 0 : index
    %68 = vector.load %arg8[%c2_67, %c0_68, %c0_69] : memref<10x18x8xf32, #tpu.memory_space<vmem>>, vector<8x16x8xf32>
    %c2_70 = arith.constant 2 : index
    %c1_71 = arith.constant 1 : index
    %c0_72 = arith.constant 0 : index
    %69 = vector.load %arg8[%c2_70, %c1_71, %c0_72] : memref<10x18x8xf32, #tpu.memory_space<vmem>>, vector<8x16x8xf32>
    %c2_73 = arith.constant 2 : index
    %c2_74 = arith.constant 2 : index
    %c0_75 = arith.constant 0 : index
    %70 = vector.load %arg8[%c2_73, %c2_74, %c0_75] : memref<10x18x8xf32, #tpu.memory_space<vmem>>, vector<8x16x8xf32>
    %c2_i32_76 = arith.constant 2 : i32
    %71 = arith.addi %0, %c2_i32_76 : i32
    %c0_77 = arith.constant 0 : index
    %72 = arith.index_cast %71 : i32 to index
    %c1_78 = arith.constant 1 : index
    %c0_79 = arith.constant 0 : index
    %73 = vector.load %arg2[%c0_77, %72, %c1_78, %c0_79] : memref<1x20x18x8xf32, #tpu.memory_space<vmem>>, vector<1x8x16x8xf32>
    %74 = vector.shape_cast %73 : vector<1x8x16x8xf32> to vector<8x16x8xf32>
    %75 = tpu.concatenate %62, %63, %64, %65, %66, %67, %68, %69, %70, %74 in 2 : vector<8x16x8xf32>, vector<8x16x8xf32>, vector<8x16x8xf32>, vector<8x16x8xf32>, vector<8x16x8xf32>, vector<8x16x8xf32>, vector<8x16x8xf32>, vector<8x16x8xf32>, vector<8x16x8xf32>, vector<8x16x8xf32> -> vector<8x16x80xf32>
    %76 = vector.shape_cast %75 : vector<8x16x80xf32> to vector<128x80xf32>
    %c0_80 = arith.constant 0 : index
    %c0_81 = arith.constant 0 : index
    %77 = vector.load %arg5[%c0_80, %c0_81] : memref<80x8xf32, #tpu.memory_space<vmem>>, vector<80x8xf32>
    %cst_82 = arith.constant dense<0.000000e+00> : vector<128x8xf32>
    %78 = tpu.matmul %76, %77, %cst_82 {dimension_numbers = #tpu.dot_dimension_numbers<[1], [0], [0], [1], [0, 0, 1, 1], [], []>} : vector<128x80xf32>, vector<80x8xf32>, vector<128x8xf32> -> vector<128x8xf32>
    %c0_83 = arith.constant 0 : index
    %c0_84 = arith.constant 0 : index
    %79 = vector.load %arg6[%c0_83, %c0_84] : memref<1x8xf32, #tpu.memory_space<vmem>>, vector<1x8xf32>
    %80 = vector.broadcast %79 : vector<1x8xf32> to vector<128x8xf32>
    %81 = arith.addf %78, %80 : vector<128x8xf32>
    %cst_85 = arith.constant 0.000000e+00 : f32
    %82 = vector.broadcast %cst_85 : f32 to vector<128x8xf32>
    %83 = arith.maximumf %81, %82 : vector<128x8xf32>
    %84 = vector.shape_cast %83 : vector<128x8xf32> to vector<1x8x16x8xf32>
    %c0_86 = arith.constant 0 : index
    %c0_87 = arith.constant 0 : index
    %c0_88 = arith.constant 0 : index
    %c0_89 = arith.constant 0 : index
    %85 = vector.load %arg7[%c0_86, %c0_87, %c0_88, %c0_89] : memref<1x8x16x8xf32, #tpu.memory_space<vmem>>, vector<1x8x16x8xf32>
    tpu.vector_store %arg7[%c0_86, %c0_87, %c0_88, %c0_89], %84 {strides = array<i32>} : memref<1x8x16x8xf32, #tpu.memory_space<vmem>>, vector<1x8x16x8xf32>,
    return
  }
  func.func @transform_0(%arg0: i32, %arg1: i32) -> (i32, i32, i32, i32) {
    %c0_i32 = arith.constant 0 : i32
    %c0_i32_0 = arith.constant 0 : i32
    %c0_i32_1 = arith.constant 0 : i32
    %c0_i32_2 = arith.constant 0 : i32
    return %arg0, %c0_i32, %c0_i32_0, %c0_i32_1 : i32, i32, i32, i32
  }
  func.func @transform_1(%arg0: i32, %arg1: i32) -> (i32, i32) {
    %c0_i32 = arith.constant 0 : i32
    %c0_i32_0 = arith.constant 0 : i32
    %c0_i32_1 = arith.constant 0 : i32
    return %c0_i32, %c0_i32_0 : i32, i32
  }
  func.func @transform_2(%arg0: i32, %arg1: i32) -> (i32, i32) {
    %c0_i32 = arith.constant 0 : i32
    %c0_i32_0 = arith.constant 0 : i32
    %c0_i32_1 = arith.constant 0 : i32
    return %c0_i32, %c0_i32_0 : i32, i32
  }
  func.func @transform_3(%arg0: i32, %arg1: i32) -> (i32, i32) {
    %c0_i32 = arith.constant 0 : i32
    %c0_i32_0 = arith.constant 0 : i32
    %c0_i32_1 = arith.constant 0 : i32
    return %c0_i32, %c0_i32_0 : i32, i32
  }
  func.func @transform_4(%arg0: i32, %arg1: i32) -> (i32, i32) {
    %c0_i32 = arith.constant 0 : i32
    %c0_i32_0 = arith.constant 0 : i32
    %c0_i32_1 = arith.constant 0 : i32
    return %c0_i32, %c0_i32_0 : i32, i32
  }
  func.func @transform_5(%arg0: i32, %arg1: i32) -> (i32, i32, i32, i32) {
    %c0_i32 = arith.constant 0 : i32
    %c0_i32_0 = arith.constant 0 : i32
    %c0_i32_1 = arith.constant 0 : i32
    return %arg0, %arg1, %c0_i32, %c0_i32_0 : i32, i32, i32, i32
  }
}

</mosaic_0001>

<llo_original>
// kernel: basic_block_forward.1
$region0: #{basic_block_forward.1}
  #allocation0 [shape = 'u32[]', space=smem, size = 0x4, offset = 0x4, fixed_abs, tag = 'smem constant byte address 0x4 - core index']
  #allocation1 [shape = 'u32[144,128]{1,0:T(1,128)}', space=vmem, size = 0x12000, scoped, tag = 'internal scratch']
  #allocation2 [shape = 'f32[10,18,8]{2,1,0:T(8,128)}', space=vmem, size = 0x1e000, scoped, tag = 'scratch operand']
  %s0 = inlined_call_operand.hbm [shape: f32[2,20,18,8], index: 0, kind: input, shape index: {}]
  %s1 = inlined_call_operand.hbm [shape: f32[72,8], index: 1, kind: input, shape index: {}]
  %s2 = inlined_call_operand.hbm [shape: f32[1,8], index: 2, kind: input, shape index: {}]
  %s3 = inlined_call_operand.hbm [shape: f32[80,8], index: 3, kind: input, shape index: {}]
  %s4 = inlined_call_operand.hbm [shape: f32[1,8], index: 4, kind: input, shape index: {}]
  %s5 = inlined_call_operand.hbm [shape: f32[2,16,16,8], index: 5, kind: output, shape index: {}]
  %s6 = sld [smem:[#allocation0]]
  $region81: #{basic_block_forward.1} parent=0
    _
  %s8 = ssub.s32 1, %s6
  %s9 = scalar_select 0, %s8, %s6
  $region1: #{basic_block_forward.1} parent=0
    #allocation3 [shape = 'u8[491520]{0}', space=vmem, size = 0x78000, scoped, tag = 'input window, operand 0']
    #allocation4 [shape = 's32[2]{0}', space=sflag, size = 0x8, scoped, tag = 'scoped memory for basic_block_forward.1']
    #allocation5 [shape = 's32[2]{0}', space=sflag, size = 0x8, scoped, tag = 'scoped memory for basic_block_forward.1']
    #allocation6 [shape = 'u8[36864]{0}', space=vmem, size = 0x9000, scoped, tag = 'input window, operand 1, single buffered']
    #allocation7 [shape = 's32[1]{0}', space=sflag, size = 0x4, scoped, tag = 'scoped memory for basic_block_forward.1']
    #allocation8 [shape = 'u8[512]{0}', space=vmem, size = 0x400, scoped, tag = 'input window, operand 2, single buffered']
    #allocation9 [shape = 'u8[40960]{0}', space=vmem, size = 0xa000, scoped, tag = 'input window, operand 3, single buffered']
    #allocation10 [shape = 's32[1]{0}', space=sflag, size = 0x4, scoped, tag = 'scoped memory for basic_block_forward.1']
    #allocation11 [shape = 'u8[512]{0}', space=vmem, size = 0x400, scoped, tag = 'input window, operand 4, single buffered']
    #allocation12 [shape = 'u8[131072]{0}', space=vmem, size = 0x20000, scoped, tag = 'output window, operand 0']
    %10 = vsyncpa [#allocation4], 0
    %s11 = scalar_lea.sflag [#allocation4], 1
    %12 = vsyncpa %s11, 0
    %13 = vsyncpa [#allocation7], 0
    %14 = vsyncpa [#allocation10], 0
    %15 = vsyncpa [#allocation5], 0
    %s16 = scalar_lea.sflag [#allocation5], 1
    %17 = vsyncpa %s16, 0
    loop: start=0, step=1, limit=6
    $region2: #{basic_block_forward.1} parent=1 // loop_pre_header
      _
    $region3: #{basic_block_forward.1} parent=1 // loop_header
      %s19 = sphi 0, %s23
      %p20 = scmp.ge.s32.totalorder %s19, 6
      %s26 = sphi 0, %s38
      %s27 = sphi 0, %s34
      %s28 = sphi 0, %s26
      %s29 = sphi 0, %s27
      %s30 = sphi 0, %s28
      %s31 = sphi 0, %s29
      %s41 = sphi 0, %s43
      %s44 = sphi 0, %s41
      %s45 = sphi 0, %s44
      %s61 = sphi 0, %s45
      %s65 = sphi 0, %s65
      %s67 = sphi 0, %s65
      %s68 = sphi 0, %s67
      %s82 = sphi 0, %s68
      %s86 = sphi 0, %s86
      %s88 = sphi 0, %s86
      %s89 = sphi 0, %s88
      %s103 = sphi 0, %s89
      %s107 = sphi 0, %s107
      %s109 = sphi 0, %s107
      %s110 = sphi 0, %s109
      %s124 = sphi 0, %s110
      %s128 = sphi 0, %s128
      %s130 = sphi 0, %s128
      %s131 = sphi 0, %s130
      %s145 = sphi 0, %s131
      %s153 = sphi 0, %s155
      %s156 = sphi 0, %s153
      %s157 = sphi 0, %s156
      %s173 = sphi 0, %s157
    $region4: #{basic_block_forward.1} parent=1 // loop_header_branch
      %22 = sbr.rel (%p20) target = $region8
    $region5: #{basic_block_forward.1} parent=1 // loop_body
      %s24 = ssub.s32 %s19, 1
      %s25 = ssub.s32 %s19, 2
      %s32 = sadd.s32 1, %s27
      %p33 = scmp.ge.s32.totalorder %s32, 2
      %s34 = scalar_select %p33, 0, %s32
      %s35 = sadd.s32 1, %s26
      %s36 = scalar_select %p33, %s35, %s26
      %p37 = scmp.ge.s32.totalorder %s36, 2
      %s38 = scalar_select %p37, 0, %s36
      %s39 = ssub.s32 %s26, %s38
      %p40 = scmp.eq.s32.totalorder %s39, 0
      %s42 = sadd.s32 %s41, 1
      %s43 = scalar_select %p40, %s41, %s42
      %p46 = pneg %p40
      %p47 = scmp.eq.s32.totalorder %s19, 3
      %p48 = por %p46, %p47
      %p49 = scmp.ne.s32.totalorder %s41, %s44
      %p50 = scmp.eq.s32.totalorder %s19, 0
      %p51 = por %p49, %p50
      %p52 = scmp.ne.s32.totalorder %s41, %s44
      %p53 = scmp.eq.s32.totalorder %s24, 3
      %p54 = por %p52, %p53
      %p55 = scmp.ne.s32.totalorder %s44, %s45
      %p56 = scmp.eq.s32.totalorder %s24, 0
      %p57 = por %p55, %p56
      %p58 = scmp.ne.s32.totalorder %s44, %s45
      %p59 = scmp.eq.s32.totalorder %s25, 3
      %p60 = por %p58, %p59
      %p62 = scmp.ne.s32.totalorder %s45, %s61
      %p63 = scmp.eq.s32.totalorder %s25, 0
      %p64 = por %p62, %p63
      %s66 = sadd.s32 %s65, 1
      %p69 = scmp.eq.s32.totalorder %s19, 3
      %p70 = scmp.ne.s32.totalorder %s65, %s67
      %p71 = scmp.eq.s32.totalorder %s19, 0
      %p72 = por %p70, %p71
      %p73 = scmp.ne.s32.totalorder %s65, %s67
      %p74 = scmp.eq.s32.totalorder %s24, 3
      %p75 = por %p73, %p74
      %p76 = scmp.ne.s32.totalorder %s67, %s68
      %p77 = scmp.eq.s32.totalorder %s24, 0
      %p78 = por %p76, %p77
      %p79 = scmp.ne.s32.totalorder %s67, %s68
      %p80 = scmp.eq.s32.totalorder %s25, 3
      %p81 = por %p79, %p80
      %p83 = scmp.ne.s32.totalorder %s68, %s82
      %p84 = scmp.eq.s32.totalorder %s25, 0
      %p85 = por %p83, %p84
      %s87 = sadd.s32 %s86, 1
      %p90 = scmp.eq.s32.totalorder %s19, 3
      %p91 = scmp.ne.s32.totalorder %s86, %s88
      %p92 = scmp.eq.s32.totalorder %s19, 0
      %p93 = por %p91, %p92
      %p94 = scmp.ne.s32.totalorder %s86, %s88
      %p95 = scmp.eq.s32.totalorder %s24, 3
      %p96 = por %p94, %p95
      %p97 = scmp.ne.s32.totalorder %s88, %s89
      %p98 = scmp.eq.s32.totalorder %s24, 0
      %p99 = por %p97, %p98
      %p100 = scmp.ne.s32.totalorder %s88, %s89
      %p101 = scmp.eq.s32.totalorder %s25, 3
      %p102 = por %p100, %p101
      %p104 = scmp.ne.s32.totalorder %s89, %s103
      %p105 = scmp.eq.s32.totalorder %s25, 0
      %p106 = por %p104, %p105
      %s108 = sadd.s32 %s107, 1
      %p111 = scmp.eq.s32.totalorder %s19, 3
      %p112 = scmp.ne.s32.totalorder %s107, %s109
      %p113 = scmp.eq.s32.totalorder %s19, 0
      %p114 = por %p112, %p113
      %p115 = scmp.ne.s32.totalorder %s107, %s109
      %p116 = scmp.eq.s32.totalorder %s24, 3
      %p117 = por %p115, %p116
      %p118 = scmp.ne.s32.totalorder %s109, %s110
      %p119 = scmp.eq.s32.totalorder %s24, 0
      %p120 = por %p118, %p119
      %p121 = scmp.ne.s32.totalorder %s109, %s110
      %p122 = scmp.eq.s32.totalorder %s25, 3
      %p123 = por %p121, %p122
      %p125 = scmp.ne.s32.totalorder %s110, %s124
      %p126 = scmp.eq.s32.totalorder %s25, 0
      %p127 = por %p125, %p126
      %s129 = sadd.s32 %s128, 1
      %p132 = scmp.eq.s32.totalorder %s19, 3
      %p133 = scmp.ne.s32.totalorder %s128, %s130
      %p134 = scmp.eq.s32.totalorder %s19, 0
      %p135 = por %p133, %p134
      %p136 = scmp.ne.s32.totalorder %s128, %s130
      %p137 = scmp.eq.s32.totalorder %s24, 3
      %p138 = por %p136, %p137
      %p139 = scmp.ne.s32.totalorder %s130, %s131
      %p140 = scmp.eq.s32.totalorder %s24, 0
      %p141 = por %p139, %p140
      %p142 = scmp.ne.s32.totalorder %s130, %s131
      %p143 = scmp.eq.s32.totalorder %s25, 3
      %p144 = por %p142, %p143
      %p146 = scmp.ne.s32.totalorder %s131, %s145
      %p147 = scmp.eq.s32.totalorder %s25, 0
      %p148 = por %p146, %p147
      %s149 = ssub.s32 %s26, %s38
      %s150 = ssub.s32 %s27, %s34
      %s151 = sor.u32 %s149, %s150
      %p152 = scmp.eq.s32.totalorder %s151, 0
      %s154 = sadd.s32 %s153, 1
      %s155 = scalar_select %p152, %s153, %s154
      %p158 = pneg %p152
      %p159 = scmp.eq.s32.totalorder %s19, 3
      %p160 = por %p158, %p159
      %p161 = scmp.ne.s32.totalorder %s153, %s156
      %p162 = scmp.eq.s32.totalorder %s19, 0
      %p163 = por %p161, %p162
      %p164 = scmp.ne.s32.totalorder %s153, %s156
      %p165 = scmp.eq.s32.totalorder %s24, 3
      %p166 = por %p164, %p165
      %p167 = scmp.ne.s32.totalorder %s156, %s157
      %p168 = scmp.eq.s32.totalorder %s24, 0
      %p169 = por %p167, %p168
      %p170 = scmp.ne.s32.totalorder %s156, %s157
      %p171 = scmp.eq.s32.totalorder %s25, 3
      %p172 = por %p170, %p171
      %p174 = scmp.ne.s32.totalorder %s157, %s173
      %p175 = scmp.eq.s32.totalorder %s25, 0
      %p176 = por %p174, %p175
      %p177 = scmp.le.s32.totalorder 1, %s19
      %p178 = scmp.lt.s32.totalorder %s19, 5
      %p179 = pnand %p177, %p178
      %p180 = pneg %p179
      // Predicated region
      $region9: #{basic_block_forward.1} parent=5 // pred_check
        _
      $region10: #{basic_block_forward.1} parent=5 // pred_check_branch
        %182 = sbr.rel (%p179) target = $region12
      $region11: #{basic_block_forward.1} parent=5 // pred_region
        %s183 = ssub.s32 %s19, 1
        // Predicated region
        $region13: #{basic_block_forward.1} parent=11 // pred_check
          %p184 = pneg %p78
        $region14: #{basic_block_forward.1} parent=11 // pred_check_branch
          %186 = sbr.rel (%p184) target = $region16
        $region15: #{basic_block_forward.1} parent=11 // pred_region
          %s188 = ssub.s32 1152, 1152
          %189 = vsyncadd [#allocation7], %s188
          %s190 = sshll.u32 [#allocation6], 4
          %s191 = int_to_ptr.vmem [resolvable:$true] %s190
          %196 = dma.hbm_to_vmem [thread:$0]  %s1, 1152, %s191, [#allocation7], 128, 128, 8
        $region16: #{basic_block_forward.1} parent=11 // pred_fallthru
          _
        // Predicated region
        $region17: #{basic_block_forward.1} parent=11 // pred_check
          %p197 = pneg %p99
        $region18: #{basic_block_forward.1} parent=11 // pred_check_branch
          %199 = sbr.rel (%p197) target = $region20
        $region19: #{basic_block_forward.1} parent=11 // pred_region
          %s201 = ssub.s32 16, 16
          %202 = vsyncadd [#allocation7], %s201
          %s204 = sshll.u32 [#allocation8], 4
          %s205 = int_to_ptr.vmem [resolvable:$true] %s204
          %207 = dma.hbm_to_vmem [thread:$0]  %s2, 16, %s205, [#allocation7]
        $region20: #{basic_block_forward.1} parent=11 // pred_fallthru
          _
        // Predicated region
        $region21: #{basic_block_forward.1} parent=11 // pred_check
          %p208 = pneg %p120
        $region22: #{basic_block_forward.1} parent=11 // pred_check_branch
          %210 = sbr.rel (%p208) target = $region24
        $region23: #{basic_block_forward.1} parent=11 // pred_region
          %s212 = ssub.s32 1280, 1280
          %213 = vsyncadd [#allocation10], %s212
          %s214 = sshll.u32 [#allocation9], 4
          %s215 = int_to_ptr.vmem [resolvable:$true] %s214
          %220 = dma.hbm_to_vmem [thread:$0]  %s3, 1280, %s215, [#allocation10], 128, 128, 8
        $region24: #{basic_block_forward.1} parent=11 // pred_fallthru
          _
        // Predicated region
        $region25: #{basic_block_forward.1} parent=11 // pred_check
          %p221 = pneg %p141
        $region26: #{basic_block_forward.1} parent=11 // pred_check_branch
          %223 = sbr.rel (%p221) target = $region28
        $region27: #{basic_block_forward.1} parent=11 // pred_region
          %s225 = ssub.s32 16, 16
          %226 = vsyncadd [#allocation10], %s225
          %s228 = sshll.u32 [#allocation11], 4
          %s229 = int_to_ptr.vmem [resolvable:$true] %s228
          %231 = dma.hbm_to_vmem [thread:$0]  %s4, 16, %s229, [#allocation10]
        $region28: #{basic_block_forward.1} parent=11 // pred_fallthru
          _
      $region12: #{basic_block_forward.1} parent=5 // pred_fallthru
        _
      %p232 = scmp.lt.s32.totalorder %s19, 4
      // Predicated region
      $region29: #{basic_block_forward.1} parent=5 // pred_check
        %p233 = pneg %p232
      $region30: #{basic_block_forward.1} parent=5 // pred_check_branch
        %235 = sbr.rel (%p233) target = $region32
      $region31: #{basic_block_forward.1} parent=5 // pred_region
        // Predicated region
        $region33: #{basic_block_forward.1} parent=31 // pred_check
          %p236 = pneg %p51
        $region34: #{basic_block_forward.1} parent=31 // pred_check_branch
          %238 = sbr.rel (%p236) target = $region36
        $region35: #{basic_block_forward.1} parent=31 // pred_region
          %s239 = sand.u32 %s41, 1
          %s240 = scalar_lea.sflag [#allocation4], %s239
          %s241 = sand.u32 %s41, 1
          %s242 = smul.addr %s241, 480
          %s243 = scalar_lea.vmem [#allocation3], %s242
          %s245 = ssub.s32 7680, 7680
          %246 = vsyncadd %s240, %s245
          %s247 = smul.addr %s26, 60
          %s248 = smul.addr %s247, 128
          %s249 = scalar_lea.hbm %s0, %s248
          %s250 = sshll.u32 %s243, 4
          %s251 = int_to_ptr.vmem [resolvable:$true] %s250
          %256 = dma.hbm_to_vmem [thread:$0]  %s249, 7680, %s251, %s240, 128, 128, 8
        $region36: #{basic_block_forward.1} parent=31 // pred_fallthru
          _
      $region32: #{basic_block_forward.1} parent=5 // pred_fallthru
        _
      %p257 = scmp.le.s32.totalorder 1, %s19
      %p258 = scmp.lt.s32.totalorder %s19, 5
      %p259 = pnand %p257, %p258
      %p260 = pneg %p259
      // Predicated region
      $region37: #{basic_block_forward.1} parent=5 // pred_check
        _
      $region38: #{basic_block_forward.1} parent=5 // pred_check_branch
        %262 = sbr.rel (%p259) target = $region40
      $region39: #{basic_block_forward.1} parent=5 // pred_region
        %s263 = ssub.s32 %s19, 1
        %s264 = sand.u32 %s44, 1
        %s265 = scalar_lea.sflag [#allocation4], %s264
        %s266 = sand.u32 %s44, 1
        %s267 = smul.addr %s266, 480
        %s268 = scalar_lea.vmem [#allocation3], %s267
        // Predicated region
        $region41: #{basic_block_forward.1} parent=39 // pred_check
          %p269 = pneg %p57
        $region42: #{basic_block_forward.1} parent=39 // pred_check_branch
          %271 = sbr.rel (%p269) target = $region44
        $region43: #{basic_block_forward.1} parent=39 // pred_region
          %272 = dma.done %s265, 7680
        $region44: #{basic_block_forward.1} parent=39 // pred_fallthru
          _
        // Predicated region
        $region45: #{basic_block_forward.1} parent=39 // pred_check
          %p273 = pneg %p78
        $region46: #{basic_block_forward.1} parent=39 // pred_check_branch
          %275 = sbr.rel (%p273) target = $region48
        $region47: #{basic_block_forward.1} parent=39 // pred_region
          %276 = dma.done [#allocation7], 1152
        $region48: #{basic_block_forward.1} parent=39 // pred_fallthru
          _
        // Predicated region
        $region49: #{basic_block_forward.1} parent=39 // pred_check
          %p277 = pneg %p99
        $region50: #{basic_block_forward.1} parent=39 // pred_check_branch
          %279 = sbr.rel (%p277) target = $region52
        $region51: #{basic_block_forward.1} parent=39 // pred_region
          %280 = dma.done [#allocation7], 16
        $region52: #{basic_block_forward.1} parent=39 // pred_fallthru
          _
        // Predicated region
        $region53: #{basic_block_forward.1} parent=39 // pred_check
          %p281 = pneg %p120
        $region54: #{basic_block_forward.1} parent=39 // pred_check_branch
          %283 = sbr.rel (%p281) target = $region56
        $region55: #{basic_block_forward.1} parent=39 // pred_region
          %284 = dma.done [#allocation10], 1280
        $region56: #{basic_block_forward.1} parent=39 // pred_fallthru
          _
        // Predicated region
        $region57: #{basic_block_forward.1} parent=39 // pred_check
          %p285 = pneg %p141
        $region58: #{basic_block_forward.1} parent=39 // pred_check_branch
          %287 = sbr.rel (%p285) target = $region60
        $region59: #{basic_block_forward.1} parent=39 // pred_region
          %288 = dma.done [#allocation10], 16
        $region60: #{basic_block_forward.1} parent=39 // pred_fallthru
          _
        %s289 = sand.u32 %s44, 1
        %s290 = scalar_lea.sflag [#allocation4], %s289
        %s291 = sand.u32 %s44, 1
        %s292 = smul.addr %s291, 480
        %s293 = scalar_lea.vmem [#allocation3], %s292
        %p294 = pneg %p57
        %p295 = pneg %p54
        %p296 = pneg %p78
        %p297 = pneg %p75
        %p298 = pneg %p99
        %p299 = pneg %p96
        %p300 = pneg %p120
        %p301 = pneg %p117
        %p302 = pneg %p141
        %p303 = pneg %p138
        %p304 = pneg %p169
        %p305 = pneg %p166
        %s306 = sand.u32 %s156, 1
        %s307 = scalar_lea.sflag [#allocation5], %s306
        %s308 = sand.u32 %s156, 1
        %s309 = smul.addr %s308, 128
        %s310 = scalar_lea.vmem [#allocation12], %s309
        %s311 = smul.u32 8, %s29
        %s312 = smul.u32 %s29, 8
        %s313 = smul.u32 %s312, 24
        %s314 = scalar_lea.vmem %s268, %s313 [#allocation3]
        %v315 = vld [vmem:[%s314] sm:$0xff]
        %v316 = vld [vmem:[%s314 + $0x8] sm:$0xff]
        %v317 = vld [vmem:[%s314 + $0x18] sm:$0xff]
        %v318 = vld [vmem:[%s314 + $0x20] sm:$0xff]
        %v319 = vld [vmem:[%s314 + $0x30] sm:$0xff]
        %v320 = vld [vmem:[%s314 + $0x38] sm:$0xff]
        %v321 = vld [vmem:[%s314 + $0x48] sm:$0xff]
        %v322 = vld [vmem:[%s314 + $0x50] sm:$0xff]
        %v323 = vld [vmem:[%s314 + $0x60] sm:$0xff]
        %v324 = vld [vmem:[%s314 + $0x68] sm:$0xff]
        %v325 = vld [vmem:[%s314 + $0x78] sm:$0xff]
        %v326 = vld [vmem:[%s314 + $0x80] sm:$0xff]
        %v327 = vld [vmem:[%s314 + $0x90] sm:$0xff]
        %v328 = vld [vmem:[%s314 + $0x98] sm:$0xff]
        %v329 = vld [vmem:[%s314 + $0xa8] sm:$0xff]
        %v330 = vld [vmem:[%s314 + $0xb0] sm:$0xff]
        %v331 = vld [vmem:[%s314 + $0xc0] sm:$0xff]
        %v332 = vld [vmem:[%s314 + $0xc8] sm:$0xff]
        %v333 = vld [vmem:[%s314 + $0xd8] sm:$0xff]
        %v334 = vld [vmem:[%s314 + $0xe0] sm:$0xff]
        %v335 = vld [vmem:[%s314 + $0x1] sm:$0xff]
        %v336 = vld [vmem:[%s314 + $0x9] sm:$0xff]
        %v337 = vld [vmem:[%s314 + $0x19] sm:$0xff]
        %v338 = vld [vmem:[%s314 + $0x21] sm:$0xff]
        %v339 = vld [vmem:[%s314 + $0x31] sm:$0xff]
        %v340 = vld [vmem:[%s314 + $0x39] sm:$0xff]
        %v341 = vld [vmem:[%s314 + $0x49] sm:$0xff]
        %v342 = vld [vmem:[%s314 + $0x51] sm:$0xff]
        %v343 = vld [vmem:[%s314 + $0x61] sm:$0xff]
        %v344 = vld [vmem:[%s314 + $0x69] sm:$0xff]
        %v345 = vld [vmem:[%s314 + $0x79] sm:$0xff]
        %v346 = vld [vmem:[%s314 + $0x81] sm:$0xff]
        %v347 = vld [vmem:[%s314 + $0x91] sm:$0xff]
        %v348 = vld [vmem:[%s314 + $0x99] sm:$0xff]
        %v349 = vld [vmem:[%s314 + $0xa9] sm:$0xff]
        %v350 = vld [vmem:[%s314 + $0xb1] sm:$0xff]
        %v351 = vld [vmem:[%s314 + $0xc1] sm:$0xff]
        %v352 = vld [vmem:[%s314 + $0xc9] sm:$0xff]
        %v353 = vld [vmem:[%s314 + $0xd9] sm:$0xff]
        %v354 = vld [vmem:[%s314 + $0xe1] sm:$0xff]
        %v355 = vld [vmem:[%s314 + $0x2] sm:$0xff]
        %v356 = vld [vmem:[%s314 + $0xa] sm:$0xff]
        %v357 = vld [vmem:[%s314 + $0x1a] sm:$0xff]
        %v358 = vld [vmem:[%s314 + $0x22] sm:$0xff]
        %v359 = vld [vmem:[%s314 + $0x32] sm:$0xff]
        %v360 = vld [vmem:[%s314 + $0x3a] sm:$0xff]
        %v361 = vld [vmem:[%s314 + $0x4a] sm:$0xff]
        %v362 = vld [vmem:[%s314 + $0x52] sm:$0xff]
        %v363 = vld [vmem:[%s314 + $0x62] sm:$0xff]
        %v364 = vld [vmem:[%s314 + $0x6a] sm:$0xff]
        %v365 = vld [vmem:[%s314 + $0x7a] sm:$0xff]
        %v366 = vld [vmem:[%s314 + $0x82] sm:$0xff]
        %v367 = vld [vmem:[%s314 + $0x92] sm:$0xff]
        %v368 = vld [vmem:[%s314 + $0x9a] sm:$0xff]
        %v369 = vld [vmem:[%s314 + $0xaa] sm:$0xff]
        %v370 = vld [vmem:[%s314 + $0xb2] sm:$0xff]
        %v371 = vld [vmem:[%s314 + $0xc2] sm:$0xff]
        %v372 = vld [vmem:[%s314 + $0xca] sm:$0xff]
        %v373 = vld [vmem:[%s314 + $0xda] sm:$0xff]
        %v374 = vld [vmem:[%s314 + $0xe2] sm:$0xff]
        %s375 = sadd.s32 %s312, 1
        %s376 = smul.u32 %s375, 24
        %s377 = scalar_lea.vmem %s268, %s376 [#allocation3]
        %v378 = vld [vmem:[%s377] sm:$0xff]
        %v379 = vld [vmem:[%s377 + $0x8] sm:$0xff]
        %v380 = vld [vmem:[%s377 + $0x18] sm:$0xff]
        %v381 = vld [vmem:[%s377 + $0x20] sm:$0xff]
        %v382 = vld [vmem:[%s377 + $0x30] sm:$0xff]
        %v383 = vld [vmem:[%s377 + $0x38] sm:$0xff]
        %v384 = vld [vmem:[%s377 + $0x48] sm:$0xff]
        %v385 = vld [vmem:[%s377 + $0x50] sm:$0xff]
        %v386 = vld [vmem:[%s377 + $0x60] sm:$0xff]
        %v387 = vld [vmem:[%s377 + $0x68] sm:$0xff]
        %v388 = vld [vmem:[%s377 + $0x78] sm:$0xff]
        %v389 = vld [vmem:[%s377 + $0x80] sm:$0xff]
        %v390 = vld [vmem:[%s377 + $0x90] sm:$0xff]
        %v391 = vld [vmem:[%s377 + $0x98] sm:$0xff]
        %v392 = vld [vmem:[%s377 + $0xa8] sm:$0xff]
        %v393 = vld [vmem:[%s377 + $0xb0] sm:$0xff]
        %v394 = vld [vmem:[%s377 + $0xc0] sm:$0xff]
        %v395 = vld [vmem:[%s377 + $0xc8] sm:$0xff]
        %v396 = vld [vmem:[%s377 + $0xd8] sm:$0xff]
        %v397 = vld [vmem:[%s377 + $0xe0] sm:$0xff]
        %v398 = vld [vmem:[%s377 + $0x1] sm:$0xff]
        %v399 = vld [vmem:[%s377 + $0x9] sm:$0xff]
        %v400 = vld [vmem:[%s377 + $0x19] sm:$0xff]
        %v401 = vld [vmem:[%s377 + $0x21] sm:$0xff]
        %v402 = vld [vmem:[%s377 + $0x31] sm:$0xff]
        %v403 = vld [vmem:[%s377 + $0x39] sm:$0xff]
        %v404 = vld [vmem:[%s377 + $0x49] sm:$0xff]
        %v405 = vld [vmem:[%s377 + $0x51] sm:$0xff]
        %v406 = vld [vmem:[%s377 + $0x61] sm:$0xff]
        %v407 = vld [vmem:[%s377 + $0x69] sm:$0xff]
        %v408 = vld [vmem:[%s377 + $0x79] sm:$0xff]
        %v409 = vld [vmem:[%s377 + $0x81] sm:$0xff]
        %v410 = vld [vmem:[%s377 + $0x91] sm:$0xff]
        %v411 = vld [vmem:[%s377 + $0x99] sm:$0xff]
        %v412 = vld [vmem:[%s377 + $0xa9] sm:$0xff]
        %v413 = vld [vmem:[%s377 + $0xb1] sm:$0xff]
        %v414 = vld [vmem:[%s377 + $0xc1] sm:$0xff]
        %v415 = vld [vmem:[%s377 + $0xc9] sm:$0xff]
        %v416 = vld [vmem:[%s377 + $0xd9] sm:$0xff]
        %v417 = vld [vmem:[%s377 + $0xe1] sm:$0xff]
        %v418 = vld [vmem:[%s377 + $0x2] sm:$0xff]
        %v419 = vld [vmem:[%s377 + $0xa] sm:$0xff]
        %v420 = vld [vmem:[%s377 + $0x1a] sm:$0xff]
        %v421 = vld [vmem:[%s377 + $0x22] sm:$0xff]
        %v422 = vld [vmem:[%s377 + $0x32] sm:$0xff]
        %v423 = vld [vmem:[%s377 + $0x3a] sm:$0xff]
        %v424 = vld [vmem:[%s377 + $0x4a] sm:$0xff]
        %v425 = vld [vmem:[%s377 + $0x52] sm:$0xff]
        %v426 = vld [vmem:[%s377 + $0x62] sm:$0xff]
        %v427 = vld [vmem:[%s377 + $0x6a] sm:$0xff]
        %v428 = vld [vmem:[%s377 + $0x7a] sm:$0xff]
        %v429 = vld [vmem:[%s377 + $0x82] sm:$0xff]
        %v430 = vld [vmem:[%s377 + $0x92] sm:$0xff]
        %v431 = vld [vmem:[%s377 + $0x9a] sm:$0xff]
        %v432 = vld [vmem:[%s377 + $0xaa] sm:$0xff]
        %v433 = vld [vmem:[%s377 + $0xb2] sm:$0xff]
        %v434 = vld [vmem:[%s377 + $0xc2] sm:$0xff]
        %v435 = vld [vmem:[%s377 + $0xca] sm:$0xff]
        %v436 = vld [vmem:[%s377 + $0xda] sm:$0xff]
        %v437 = vld [vmem:[%s377 + $0xe2] sm:$0xff]
        %s438 = sadd.s32 %s312, 2
        %s439 = smul.u32 %s438, 24
        %s440 = scalar_lea.vmem %s268, %s439 [#allocation3]
        %v441 = vld [vmem:[%s440] sm:$0xff]
        %v442 = vld [vmem:[%s440 + $0x8] sm:$0xff]
        %v443 = vld [vmem:[%s440 + $0x18] sm:$0xff]
        %v444 = vld [vmem:[%s440 + $0x20] sm:$0xff]
        %v445 = vld [vmem:[%s440 + $0x30] sm:$0xff]
        %v446 = vld [vmem:[%s440 + $0x38] sm:$0xff]
        %v447 = vld [vmem:[%s440 + $0x48] sm:$0xff]
        %v448 = vld [vmem:[%s440 + $0x50] sm:$0xff]
        %v449 = vld [vmem:[%s440 + $0x60] sm:$0xff]
        %v450 = vld [vmem:[%s440 + $0x68] sm:$0xff]
        %v451 = vld [vmem:[%s440 + $0x78] sm:$0xff]
        %v452 = vld [vmem:[%s440 + $0x80] sm:$0xff]
        %v453 = vld [vmem:[%s440 + $0x90] sm:$0xff]
        %v454 = vld [vmem:[%s440 + $0x98] sm:$0xff]
        %v455 = vld [vmem:[%s440 + $0xa8] sm:$0xff]
        %v456 = vld [vmem:[%s440 + $0xb0] sm:$0xff]
        %v457 = vld [vmem:[%s440 + $0xc0] sm:$0xff]
        %v458 = vld [vmem:[%s440 + $0xc8] sm:$0xff]
        %v459 = vld [vmem:[%s440 + $0xd8] sm:$0xff]
        %v460 = vld [vmem:[%s440 + $0xe0] sm:$0xff]
        %v461 = vld [vmem:[%s440 + $0x1] sm:$0xff]
        %v462 = vld [vmem:[%s440 + $0x9] sm:$0xff]
        %v463 = vld [vmem:[%s440 + $0x19] sm:$0xff]
        %v464 = vld [vmem:[%s440 + $0x21] sm:$0xff]
        %v465 = vld [vmem:[%s440 + $0x31] sm:$0xff]
        %v466 = vld [vmem:[%s440 + $0x39] sm:$0xff]
        %v467 = vld [vmem:[%s440 + $0x49] sm:$0xff]
        %v468 = vld [vmem:[%s440 + $0x51] sm:$0xff]
        %v469 = vld [vmem:[%s440 + $0x61] sm:$0xff]
        %v470 = vld [vmem:[%s440 + $0x69] sm:$0xff]
        %v471 = vld [vmem:[%s440 + $0x79] sm:$0xff]
        %v472 = vld [vmem:[%s440 + $0x81] sm:$0xff]
        %v473 = vld [vmem:[%s440 + $0x91] sm:$0xff]
        %v474 = vld [vmem:[%s440 + $0x99] sm:$0xff]
        %v475 = vld [vmem:[%s440 + $0xa9] sm:$0xff]
        %v476 = vld [vmem:[%s440 + $0xb1] sm:$0xff]
        %v477 = vld [vmem:[%s440 + $0xc1] sm:$0xff]
        %v478 = vld [vmem:[%s440 + $0xc9] sm:$0xff]
        %v479 = vld [vmem:[%s440 + $0xd9] sm:$0xff]
        %v480 = vld [vmem:[%s440 + $0xe1] sm:$0xff]
        %v481 = vld [vmem:[%s440 + $0x2] sm:$0xff]
        %v482 = vld [vmem:[%s440 + $0xa] sm:$0xff]
        %v483 = vld [vmem:[%s440 + $0x1a] sm:$0xff]
        %v484 = vld [vmem:[%s440 + $0x22] sm:$0xff]
        %v485 = vld [vmem:[%s440 + $0x32] sm:$0xff]
        %v486 = vld [vmem:[%s440 + $0x3a] sm:$0xff]
        %v487 = vld [vmem:[%s440 + $0x4a] sm:$0xff]
        %v488 = vld [vmem:[%s440 + $0x52] sm:$0xff]
        %v489 = vld [vmem:[%s440 + $0x62] sm:$0xff]
        %v490 = vld [vmem:[%s440 + $0x6a] sm:$0xff]
        %v491 = vld [vmem:[%s440 + $0x7a] sm:$0xff]
        %v492 = vld [vmem:[%s440 + $0x82] sm:$0xff]
        %v493 = vld [vmem:[%s440 + $0x92] sm:$0xff]
        %v494 = vld [vmem:[%s440 + $0x9a] sm:$0xff]
        %v495 = vld [vmem:[%s440 + $0xaa] sm:$0xff]
        %v496 = vld [vmem:[%s440 + $0xb2] sm:$0xff]
        %v497 = vld [vmem:[%s440 + $0xc2] sm:$0xff]
        %v498 = vld [vmem:[%s440 + $0xca] sm:$0xff]
        %v499 = vld [vmem:[%s440 + $0xda] sm:$0xff]
        %v500 = vld [vmem:[%s440 + $0xe2] sm:$0xff]
        %521 = vrot.lane.b32.xlu0 %v335, 8
        %v522 = vpop.permute.xlu0 %521
        %523 = vrot.lane.b32.xlu0 %v336, 8
        %v524 = vpop.permute.xlu0 %523
        %525 = vrot.lane.b32.xlu0 %v337, 8
        %v526 = vpop.permute.xlu0 %525
        %527 = vrot.lane.b32.xlu0 %v338, 8
        %v528 = vpop.permute.xlu0 %527
        %529 = vrot.lane.b32.xlu0 %v339, 8
        %v530 = vpop.permute.xlu0 %529
        %531 = vrot.lane.b32.xlu0 %v340, 8
        %v532 = vpop.permute.xlu0 %531
        %533 = vrot.lane.b32.xlu0 %v341, 8
        %v534 = vpop.permute.xlu0 %533
        %535 = vrot.lane.b32.xlu0 %v342, 8
        %v536 = vpop.permute.xlu0 %535
        %537 = vrot.lane.b32.xlu0 %v343, 8
        %v538 = vpop.permute.xlu0 %537
        %539 = vrot.lane.b32.xlu0 %v344, 8
        %v540 = vpop.permute.xlu0 %539
        %541 = vrot.lane.b32.xlu0 %v345, 8
        %v542 = vpop.permute.xlu0 %541
        %543 = vrot.lane.b32.xlu0 %v346, 8
        %v544 = vpop.permute.xlu0 %543
        %545 = vrot.lane.b32.xlu0 %v347, 8
        %v546 = vpop.permute.xlu0 %545
        %547 = vrot.lane.b32.xlu0 %v348, 8
        %v548 = vpop.permute.xlu0 %547
        %549 = vrot.lane.b32.xlu0 %v349, 8
        %v550 = vpop.permute.xlu0 %549
        %551 = vrot.lane.b32.xlu0 %v350, 8
        %v552 = vpop.permute.xlu0 %551
        %553 = vrot.lane.b32.xlu0 %v351, 8
        %v554 = vpop.permute.xlu0 %553
        %555 = vrot.lane.b32.xlu0 %v352, 8
        %v556 = vpop.permute.xlu0 %555
        %557 = vrot.lane.b32.xlu0 %v353, 8
        %v558 = vpop.permute.xlu0 %557
        %559 = vrot.lane.b32.xlu0 %v354, 8
        %v560 = vpop.permute.xlu0 %559
        %601 = vrot.lane.b32.xlu0 %v355, 16
        %v602 = vpop.permute.xlu0 %601
        %603 = vrot.lane.b32.xlu0 %v356, 16
        %v604 = vpop.permute.xlu0 %603
        %605 = vrot.lane.b32.xlu0 %v357, 16
        %v606 = vpop.permute.xlu0 %605
        %607 = vrot.lane.b32.xlu0 %v358, 16
        %v608 = vpop.permute.xlu0 %607
        %609 = vrot.lane.b32.xlu0 %v359, 16
        %v610 = vpop.permute.xlu0 %609
        %611 = vrot.lane.b32.xlu0 %v360, 16
        %v612 = vpop.permute.xlu0 %611
        %613 = vrot.lane.b32.xlu0 %v361, 16
        %v614 = vpop.permute.xlu0 %613
        %615 = vrot.lane.b32.xlu0 %v362, 16
        %v616 = vpop.permute.xlu0 %615
        %617 = vrot.lane.b32.xlu0 %v363, 16
        %v618 = vpop.permute.xlu0 %617
        %619 = vrot.lane.b32.xlu0 %v364, 16
        %v620 = vpop.permute.xlu0 %619
        %621 = vrot.lane.b32.xlu0 %v365, 16
        %v622 = vpop.permute.xlu0 %621
        %623 = vrot.lane.b32.xlu0 %v366, 16
        %v624 = vpop.permute.xlu0 %623
        %625 = vrot.lane.b32.xlu0 %v367, 16
        %v626 = vpop.permute.xlu0 %625
        %627 = vrot.lane.b32.xlu0 %v368, 16
        %v628 = vpop.permute.xlu0 %627
        %629 = vrot.lane.b32.xlu0 %v369, 16
        %v630 = vpop.permute.xlu0 %629
        %631 = vrot.lane.b32.xlu0 %v370, 16
        %v632 = vpop.permute.xlu0 %631
        %633 = vrot.lane.b32.xlu0 %v371, 16
        %v634 = vpop.permute.xlu0 %633
        %635 = vrot.lane.b32.xlu0 %v372, 16
        %v636 = vpop.permute.xlu0 %635
        %637 = vrot.lane.b32.xlu0 %v373, 16
        %v638 = vpop.permute.xlu0 %637
        %639 = vrot.lane.b32.xlu0 %v374, 16
        %v640 = vpop.permute.xlu0 %639
        %681 = vrot.lane.b32.xlu0 %v378, 24
        %v682 = vpop.permute.xlu0 %681
        %683 = vrot.lane.b32.xlu0 %v379, 24
        %v684 = vpop.permute.xlu0 %683
        %685 = vrot.lane.b32.xlu0 %v380, 24
        %v686 = vpop.permute.xlu0 %685
        %687 = vrot.lane.b32.xlu0 %v381, 24
        %v688 = vpop.permute.xlu0 %687
        %689 = vrot.lane.b32.xlu0 %v382, 24
        %v690 = vpop.permute.xlu0 %689
        %691 = vrot.lane.b32.xlu0 %v383, 24
        %v692 = vpop.permute.xlu0 %691
        %693 = vrot.lane.b32.xlu0 %v384, 24
        %v694 = vpop.permute.xlu0 %693
        %695 = vrot.lane.b32.xlu0 %v385, 24
        %v696 = vpop.permute.xlu0 %695
        %697 = vrot.lane.b32.xlu0 %v386, 24
        %v698 = vpop.permute.xlu0 %697
        %699 = vrot.lane.b32.xlu0 %v387, 24
        %v700 = vpop.permute.xlu0 %699
        %701 = vrot.lane.b32.xlu0 %v388, 24
        %v702 = vpop.permute.xlu0 %701
        %703 = vrot.lane.b32.xlu0 %v389, 24
        %v704 = vpop.permute.xlu0 %703
        %705 = vrot.lane.b32.xlu0 %v390, 24
        %v706 = vpop.permute.xlu0 %705
        %707 = vrot.lane.b32.xlu0 %v391, 24
        %v708 = vpop.permute.xlu0 %707
        %709 = vrot.lane.b32.xlu0 %v392, 24
        %v710 = vpop.permute.xlu0 %709
        %711 = vrot.lane.b32.xlu0 %v393, 24
        %v712 = vpop.permute.xlu0 %711
        %713 = vrot.lane.b32.xlu0 %v394, 24
        %v714 = vpop.permute.xlu0 %713
        %715 = vrot.lane.b32.xlu0 %v395, 24
        %v716 = vpop.permute.xlu0 %715
        %717 = vrot.lane.b32.xlu0 %v396, 24
        %v718 = vpop.permute.xlu0 %717
        %719 = vrot.lane.b32.xlu0 %v397, 24
        %v720 = vpop.permute.xlu0 %719
        %761 = vrot.lane.b32.xlu0 %v398, 32
        %v762 = vpop.permute.xlu0 %761
        %763 = vrot.lane.b32.xlu0 %v399, 32
        %v764 = vpop.permute.xlu0 %763
        %765 = vrot.lane.b32.xlu0 %v400, 32
        %v766 = vpop.permute.xlu0 %765
        %767 = vrot.lane.b32.xlu0 %v401, 32
        %v768 = vpop.permute.xlu0 %767
        %769 = vrot.lane.b32.xlu0 %v402, 32
        %v770 = vpop.permute.xlu0 %769
        %771 = vrot.lane.b32.xlu0 %v403, 32
        %v772 = vpop.permute.xlu0 %771
        %773 = vrot.lane.b32.xlu0 %v404, 32
        %v774 = vpop.permute.xlu0 %773
        %775 = vrot.lane.b32.xlu0 %v405, 32
        %v776 = vpop.permute.xlu0 %775
        %777 = vrot.lane.b32.xlu0 %v406, 32
        %v778 = vpop.permute.xlu0 %777
        %779 = vrot.lane.b32.xlu0 %v407, 32
        %v780 = vpop.permute.xlu0 %779
        %781 = vrot.lane.b32.xlu0 %v408, 32
        %v782 = vpop.permute.xlu0 %781
        %783 = vrot.lane.b32.xlu0 %v409, 32
        %v784 = vpop.permute.xlu0 %783
        %785 = vrot.lane.b32.xlu0 %v410, 32
        %v786 = vpop.permute.xlu0 %785
        %787 = vrot.lane.b32.xlu0 %v411, 32
        %v788 = vpop.permute.xlu0 %787
        %789 = vrot.lane.b32.xlu0 %v412, 32
        %v790 = vpop.permute.xlu0 %789
        %791 = vrot.lane.b32.xlu0 %v413, 32
        %v792 = vpop.permute.xlu0 %791
        %793 = vrot.lane.b32.xlu0 %v414, 32
        %v794 = vpop.permute.xlu0 %793
        %795 = vrot.lane.b32.xlu0 %v415, 32
        %v796 = vpop.permute.xlu0 %795
        %797 = vrot.lane.b32.xlu0 %v416, 32
        %v798 = vpop.permute.xlu0 %797
        %799 = vrot.lane.b32.xlu0 %v417, 32
        %v800 = vpop.permute.xlu0 %799
        %841 = vrot.lane.b32.xlu0 %v418, 40
        %v842 = vpop.permute.xlu0 %841
        %843 = vrot.lane.b32.xlu0 %v419, 40
        %v844 = vpop.permute.xlu0 %843
        %845 = vrot.lane.b32.xlu0 %v420, 40
        %v846 = vpop.permute.xlu0 %845
        %847 = vrot.lane.b32.xlu0 %v421, 40
        %v848 = vpop.permute.xlu0 %847
        %849 = vrot.lane.b32.xlu0 %v422, 40
        %v850 = vpop.permute.xlu0 %849
        %851 = vrot.lane.b32.xlu0 %v423, 40
        %v852 = vpop.permute.xlu0 %851
        %853 = vrot.lane.b32.xlu0 %v424, 40
        %v854 = vpop.permute.xlu0 %853
        %855 = vrot.lane.b32.xlu0 %v425, 40
        %v856 = vpop.permute.xlu0 %855
        %857 = vrot.lane.b32.xlu0 %v426, 40
        %v858 = vpop.permute.xlu0 %857
        %859 = vrot.lane.b32.xlu0 %v427, 40
        %v860 = vpop.permute.xlu0 %859
        %861 = vrot.lane.b32.xlu0 %v428, 40
        %v862 = vpop.permute.xlu0 %861
        %863 = vrot.lane.b32.xlu0 %v429, 40
        %v864 = vpop.permute.xlu0 %863
        %865 = vrot.lane.b32.xlu0 %v430, 40
        %v866 = vpop.permute.xlu0 %865
        %867 = vrot.lane.b32.xlu0 %v431, 40
        %v868 = vpop.permute.xlu0 %867
        %869 = vrot.lane.b32.xlu0 %v432, 40
        %v870 = vpop.permute.xlu0 %869
        %871 = vrot.lane.b32.xlu0 %v433, 40
        %v872 = vpop.permute.xlu0 %871
        %873 = vrot.lane.b32.xlu0 %v434, 40
        %v874 = vpop.permute.xlu0 %873
        %875 = vrot.lane.b32.xlu0 %v435, 40
        %v876 = vpop.permute.xlu0 %875
        %877 = vrot.lane.b32.xlu0 %v436, 40
        %v878 = vpop.permute.xlu0 %877
        %879 = vrot.lane.b32.xlu0 %v437, 40
        %v880 = vpop.permute.xlu0 %879
        %921 = vrot.lane.b32.xlu0 %v441, 48
        %v922 = vpop.permute.xlu0 %921
        %923 = vrot.lane.b32.xlu0 %v442, 48
        %v924 = vpop.permute.xlu0 %923
        %925 = vrot.lane.b32.xlu0 %v443, 48
        %v926 = vpop.permute.xlu0 %925
        %927 = vrot.lane.b32.xlu0 %v444, 48
        %v928 = vpop.permute.xlu0 %927
        %929 = vrot.lane.b32.xlu0 %v445, 48
        %v930 = vpop.permute.xlu0 %929
        %931 = vrot.lane.b32.xlu0 %v446, 48
        %v932 = vpop.permute.xlu0 %931
        %933 = vrot.lane.b32.xlu0 %v447, 48
        %v934 = vpop.permute.xlu0 %933
        %935 = vrot.lane.b32.xlu0 %v448, 48
        %v936 = vpop.permute.xlu0 %935
        %937 = vrot.lane.b32.xlu0 %v449, 48
        %v938 = vpop.permute.xlu0 %937
        %939 = vrot.lane.b32.xlu0 %v450, 48
        %v940 = vpop.permute.xlu0 %939
        %941 = vrot.lane.b32.xlu0 %v451, 48
        %v942 = vpop.permute.xlu0 %941
        %943 = vrot.lane.b32.xlu0 %v452, 48
        %v944 = vpop.permute.xlu0 %943
        %945 = vrot.lane.b32.xlu0 %v453, 48
        %v946 = vpop.permute.xlu0 %945
        %947 = vrot.lane.b32.xlu0 %v454, 48
        %v948 = vpop.permute.xlu0 %947
        %949 = vrot.lane.b32.xlu0 %v455, 48
        %v950 = vpop.permute.xlu0 %949
        %951 = vrot.lane.b32.xlu0 %v456, 48
        %v952 = vpop.permute.xlu0 %951
        %953 = vrot.lane.b32.xlu0 %v457, 48
        %v954 = vpop.permute.xlu0 %953
        %955 = vrot.lane.b32.xlu0 %v458, 48
        %v956 = vpop.permute.xlu0 %955
        %957 = vrot.lane.b32.xlu0 %v459, 48
        %v958 = vpop.permute.xlu0 %957
        %959 = vrot.lane.b32.xlu0 %v460, 48
        %v960 = vpop.permute.xlu0 %959
        %1001 = vrot.lane.b32.xlu0 %v461, 56
        %v1002 = vpop.permute.xlu0 %1001
        %1003 = vrot.lane.b32.xlu0 %v462, 56
        %v1004 = vpop.permute.xlu0 %1003
        %1005 = vrot.lane.b32.xlu0 %v463, 56
        %v1006 = vpop.permute.xlu0 %1005
        %1007 = vrot.lane.b32.xlu0 %v464, 56
        %v1008 = vpop.permute.xlu0 %1007
        %1009 = vrot.lane.b32.xlu0 %v465, 56
        %v1010 = vpop.permute.xlu0 %1009
        %1011 = vrot.lane.b32.xlu0 %v466, 56
        %v1012 = vpop.permute.xlu0 %1011
        %1013 = vrot.lane.b32.xlu0 %v467, 56
        %v1014 = vpop.permute.xlu0 %1013
        %1015 = vrot.lane.b32.xlu0 %v468, 56
        %v1016 = vpop.permute.xlu0 %1015
        %1017 = vrot.lane.b32.xlu0 %v469, 56
        %v1018 = vpop.permute.xlu0 %1017
        %1019 = vrot.lane.b32.xlu0 %v470, 56
        %v1020 = vpop.permute.xlu0 %1019
        %1021 = vrot.lane.b32.xlu0 %v471, 56
        %v1022 = vpop.permute.xlu0 %1021
        %1023 = vrot.lane.b32.xlu0 %v472, 56
        %v1024 = vpop.permute.xlu0 %1023
        %1025 = vrot.lane.b32.xlu0 %v473, 56
        %v1026 = vpop.permute.xlu0 %1025
        %1027 = vrot.lane.b32.xlu0 %v474, 56
        %v1028 = vpop.permute.xlu0 %1027
        %1029 = vrot.lane.b32.xlu0 %v475, 56
        %v1030 = vpop.permute.xlu0 %1029
        %1031 = vrot.lane.b32.xlu0 %v476, 56
        %v1032 = vpop.permute.xlu0 %1031
        %1033 = vrot.lane.b32.xlu0 %v477, 56
        %v1034 = vpop.permute.xlu0 %1033
        %1035 = vrot.lane.b32.xlu0 %v478, 56
        %v1036 = vpop.permute.xlu0 %1035
        %1037 = vrot.lane.b32.xlu0 %v479, 56
        %v1038 = vpop.permute.xlu0 %1037
        %1039 = vrot.lane.b32.xlu0 %v480, 56
        %v1040 = vpop.permute.xlu0 %1039
        %1081 = vrot.lane.b32.xlu0 %v481, 64
        %v1082 = vpop.permute.xlu0 %1081
        %1083 = vrot.lane.b32.xlu0 %v482, 64
        %v1084 = vpop.permute.xlu0 %1083
        %1085 = vrot.lane.b32.xlu0 %v483, 64
        %v1086 = vpop.permute.xlu0 %1085
        %1087 = vrot.lane.b32.xlu0 %v484, 64
        %v1088 = vpop.permute.xlu0 %1087
        %1089 = vrot.lane.b32.xlu0 %v485, 64
        %v1090 = vpop.permute.xlu0 %1089
        %1091 = vrot.lane.b32.xlu0 %v486, 64
        %v1092 = vpop.permute.xlu0 %1091
        %1093 = vrot.lane.b32.xlu0 %v487, 64
        %v1094 = vpop.permute.xlu0 %1093
        %1095 = vrot.lane.b32.xlu0 %v488, 64
        %v1096 = vpop.permute.xlu0 %1095
        %1097 = vrot.lane.b32.xlu0 %v489, 64
        %v1098 = vpop.permute.xlu0 %1097
        %1099 = vrot.lane.b32.xlu0 %v490, 64
        %v1100 = vpop.permute.xlu0 %1099
        %1101 = vrot.lane.b32.xlu0 %v491, 64
        %v1102 = vpop.permute.xlu0 %1101
        %1103 = vrot.lane.b32.xlu0 %v492, 64
        %v1104 = vpop.permute.xlu0 %1103
        %1105 = vrot.lane.b32.xlu0 %v493, 64
        %v1106 = vpop.permute.xlu0 %1105
        %1107 = vrot.lane.b32.xlu0 %v494, 64
        %v1108 = vpop.permute.xlu0 %1107
        %1109 = vrot.lane.b32.xlu0 %v495, 64
        %v1110 = vpop.permute.xlu0 %1109
        %1111 = vrot.lane.b32.xlu0 %v496, 64
        %v1112 = vpop.permute.xlu0 %1111
        %1113 = vrot.lane.b32.xlu0 %v497, 64
        %v1114 = vpop.permute.xlu0 %1113
        %1115 = vrot.lane.b32.xlu0 %v498, 64
        %v1116 = vpop.permute.xlu0 %1115
        %1117 = vrot.lane.b32.xlu0 %v499, 64
        %v1118 = vpop.permute.xlu0 %1117
        %1119 = vrot.lane.b32.xlu0 %v500, 64
        %v1120 = vpop.permute.xlu0 %1119
        %vm1141 = vcmask 64512
        %v1142 = vsel %vm1141, %v315, %v522
        %v1143 = vsel %vm1141, %v316, %v524
        %v1144 = vsel %vm1141, %v317, %v526
        %v1145 = vsel %vm1141, %v318, %v528
        %v1146 = vsel %vm1141, %v319, %v530
        %v1147 = vsel %vm1141, %v320, %v532
        %v1148 = vsel %vm1141, %v321, %v534
        %v1149 = vsel %vm1141, %v322, %v536
        %v1150 = vsel %vm1141, %v323, %v538
        %v1151 = vsel %vm1141, %v324, %v540
        %v1152 = vsel %vm1141, %v325, %v542
        %v1153 = vsel %vm1141, %v326, %v544
        %v1154 = vsel %vm1141, %v327, %v546
        %v1155 = vsel %vm1141, %v328, %v548
        %v1156 = vsel %vm1141, %v329, %v550
        %v1157 = vsel %vm1141, %v330, %v552
        %v1158 = vsel %vm1141, %v331, %v554
        %v1159 = vsel %vm1141, %v332, %v556
        %v1160 = vsel %vm1141, %v333, %v558
        %v1161 = vsel %vm1141, %v334, %v560
        %vm1162 = vcmask 130048
        %v1163 = vsel %vm1162, %v1142, %v602
        %v1164 = vsel %vm1162, %v1143, %v604
        %v1165 = vsel %vm1162, %v1144, %v606
        %v1166 = vsel %vm1162, %v1145, %v608
        %v1167 = vsel %vm1162, %v1146, %v610
        %v1168 = vsel %vm1162, %v1147, %v612
        %v1169 = vsel %vm1162, %v1148, %v614
        %v1170 = vsel %vm1162, %v1149, %v616
        %v1171 = vsel %vm1162, %v1150, %v618
        %v1172 = vsel %vm1162, %v1151, %v620
        %v1173 = vsel %vm1162, %v1152, %v622
        %v1174 = vsel %vm1162, %v1153, %v624
        %v1175 = vsel %vm1162, %v1154, %v626
        %v1176 = vsel %vm1162, %v1155, %v628
        %v1177 = vsel %vm1162, %v1156, %v630
        %v1178 = vsel %vm1162, %v1157, %v632
        %v1179 = vsel %vm1162, %v1158, %v634
        %v1180 = vsel %vm1162, %v1159, %v636
        %v1181 = vsel %vm1162, %v1160, %v638
        %v1182 = vsel %vm1162, %v1161, %v640
        %vm1183 = vcmask 195584
        %v1184 = vsel %vm1183, %v1163, %v682
        %v1185 = vsel %vm1183, %v1164, %v684
        %v1186 = vsel %vm1183, %v1165, %v686
        %v1187 = vsel %vm1183, %v1166, %v688
        %v1188 = vsel %vm1183, %v1167, %v690
        %v1189 = vsel %vm1183, %v1168, %v692
        %v1190 = vsel %vm1183, %v1169, %v694
        %v1191 = vsel %vm1183, %v1170, %v696
        %v1192 = vsel %vm1183, %v1171, %v698
        %v1193 = vsel %vm1183, %v1172, %v700
        %v1194 = vsel %vm1183, %v1173, %v702
        %v1195 = vsel %vm1183, %v1174, %v704
        %v1196 = vsel %vm1183, %v1175, %v706
        %v1197 = vsel %vm1183, %v1176, %v708
        %v1198 = vsel %vm1183, %v1177, %v710
        %v1199 = vsel %vm1183, %v1178, %v712
        %v1200 = vsel %vm1183, %v1179, %v714
        %v1201 = vsel %vm1183, %v1180, %v716
        %v1202 = vsel %vm1183, %v1181, %v718
        %v1203 = vsel %vm1183, %v1182, %v720
        %vm1204 = vcmask 261120
        %v1205 = vsel %vm1204, %v1184, %v762
        %v1206 = vsel %vm1204, %v1185, %v764
        %v1207 = vsel %vm1204, %v1186, %v766
        %v1208 = vsel %vm1204, %v1187, %v768
        %v1209 = vsel %vm1204, %v1188, %v770
        %v1210 = vsel %vm1204, %v1189, %v772
        %v1211 = vsel %vm1204, %v1190, %v774
        %v1212 = vsel %vm1204, %v1191, %v776
        %v1213 = vsel %vm1204, %v1192, %v778
        %v1214 = vsel %vm1204, %v1193, %v780
        %v1215 = vsel %vm1204, %v1194, %v782
        %v1216 = vsel %vm1204, %v1195, %v784
        %v1217 = vsel %vm1204, %v1196, %v786
        %v1218 = vsel %vm1204, %v1197, %v788
        %v1219 = vsel %vm1204, %v1198, %v790
        %v1220 = vsel %vm1204, %v1199, %v792
        %v1221 = vsel %vm1204, %v1200, %v794
        %v1222 = vsel %vm1204, %v1201, %v796
        %v1223 = vsel %vm1204, %v1202, %v798
        %v1224 = vsel %vm1204, %v1203, %v800
        %vm1225 = vcmask 326656
        %v1226 = vsel %vm1225, %v1205, %v842
        %v1227 = vsel %vm1225, %v1206, %v844
        %v1228 = vsel %vm1225, %v1207, %v846
        %v1229 = vsel %vm1225, %v1208, %v848
        %v1230 = vsel %vm1225, %v1209, %v850
        %v1231 = vsel %vm1225, %v1210, %v852
        %v1232 = vsel %vm1225, %v1211, %v854
        %v1233 = vsel %vm1225, %v1212, %v856
        %v1234 = vsel %vm1225, %v1213, %v858
        %v1235 = vsel %vm1225, %v1214, %v860
        %v1236 = vsel %vm1225, %v1215, %v862
        %v1237 = vsel %vm1225, %v1216, %v864
        %v1238 = vsel %vm1225, %v1217, %v866
        %v1239 = vsel %vm1225, %v1218, %v868
        %v1240 = vsel %vm1225, %v1219, %v870
        %v1241 = vsel %vm1225, %v1220, %v872
        %v1242 = vsel %vm1225, %v1221, %v874
        %v1243 = vsel %vm1225, %v1222, %v876
        %v1244 = vsel %vm1225, %v1223, %v878
        %v1245 = vsel %vm1225, %v1224, %v880
        %vm1246 = vcmask 392192
        %v1247 = vsel %vm1246, %v1226, %v922
        %v1248 = vsel %vm1246, %v1227, %v924
        %v1249 = vsel %vm1246, %v1228, %v926
        %v1250 = vsel %vm1246, %v1229, %v928
        %v1251 = vsel %vm1246, %v1230, %v930
        %v1252 = vsel %vm1246, %v1231, %v932
        %v1253 = vsel %vm1246, %v1232, %v934
        %v1254 = vsel %vm1246, %v1233, %v936
        %v1255 = vsel %vm1246, %v1234, %v938
        %v1256 = vsel %vm1246, %v1235, %v940
        %v1257 = vsel %vm1246, %v1236, %v942
        %v1258 = vsel %vm1246, %v1237, %v944
        %v1259 = vsel %vm1246, %v1238, %v946
        %v1260 = vsel %vm1246, %v1239, %v948
        %v1261 = vsel %vm1246, %v1240, %v950
        %v1262 = vsel %vm1246, %v1241, %v952
        %v1263 = vsel %vm1246, %v1242, %v954
        %v1264 = vsel %vm1246, %v1243, %v956
        %v1265 = vsel %vm1246, %v1244, %v958
        %v1266 = vsel %vm1246, %v1245, %v960
        %vm1267 = vcmask 457728
        %v1268 = vsel %vm1267, %v1247, %v1002
        %v1269 = vsel %vm1267, %v1248, %v1004
        %v1270 = vsel %vm1267, %v1249, %v1006
        %v1271 = vsel %vm1267, %v1250, %v1008
        %v1272 = vsel %vm1267, %v1251, %v1010
        %v1273 = vsel %vm1267, %v1252, %v1012
        %v1274 = vsel %vm1267, %v1253, %v1014
        %v1275 = vsel %vm1267, %v1254, %v1016
        %v1276 = vsel %vm1267, %v1255, %v1018
        %v1277 = vsel %vm1267, %v1256, %v1020
        %v1278 = vsel %vm1267, %v1257, %v1022
        %v1279 = vsel %vm1267, %v1258, %v1024
        %v1280 = vsel %vm1267, %v1259, %v1026
        %v1281 = vsel %vm1267, %v1260, %v1028
        %v1282 = vsel %vm1267, %v1261, %v1030
        %v1283 = vsel %vm1267, %v1262, %v1032
        %v1284 = vsel %vm1267, %v1263, %v1034
        %v1285 = vsel %vm1267, %v1264, %v1036
        %v1286 = vsel %vm1267, %v1265, %v1038
        %v1287 = vsel %vm1267, %v1266, %v1040
        %vm1288 = vcmask 523264
        %v1289 = vsel %vm1288, %v1268, %v1082
        %v1290 = vsel %vm1288, %v1269, %v1084
        %v1291 = vsel %vm1288, %v1270, %v1086
        %v1292 = vsel %vm1288, %v1271, %v1088
        %v1293 = vsel %vm1288, %v1272, %v1090
        %v1294 = vsel %vm1288, %v1273, %v1092
        %v1295 = vsel %vm1288, %v1274, %v1094
        %v1296 = vsel %vm1288, %v1275, %v1096
        %v1297 = vsel %vm1288, %v1276, %v1098
        %v1298 = vsel %vm1288, %v1277, %v1100
        %v1299 = vsel %vm1288, %v1278, %v1102
        %v1300 = vsel %vm1288, %v1279, %v1104
        %v1301 = vsel %vm1288, %v1280, %v1106
        %v1302 = vsel %vm1288, %v1281, %v1108
        %v1303 = vsel %vm1288, %v1282, %v1110
        %v1304 = vsel %vm1288, %v1283, %v1112
        %v1305 = vsel %vm1288, %v1284, %v1114
        %v1306 = vsel %vm1288, %v1285, %v1116
        %v1307 = vsel %vm1288, %v1286, %v1118
        %v1308 = vsel %vm1288, %v1287, %v1120
        %v1309 = vld [vmem:[#allocation6] sm:$0xff]
        %v1310 = vld [vmem:[#allocation6 + $0x8] sm:$0xff]
        %v1311 = vld [vmem:[#allocation6 + $0x10] sm:$0xff]
        %v1312 = vld [vmem:[#allocation6 + $0x18] sm:$0xff]
        %v1313 = vld [vmem:[#allocation6 + $0x20] sm:$0xff]
        %v1314 = vld [vmem:[#allocation6 + $0x28] sm:$0xff]
        %v1315 = vld [vmem:[#allocation6 + $0x30] sm:$0xff]
        %v1316 = vld [vmem:[#allocation6 + $0x38] sm:$0xff]
        %v1317 = vld [vmem:[#allocation6 + $0x40] sm:$0xff]
        %v1318 = vld [vmem:[#allocation8] sm:$0x1]
        %v1320 = vlaneseq
        %v1321 = vshrl.u32 %v1320, 7
        %v1322 = vsub.s32 0, %v1321
        %v1323 = vrot.slane %v1318, %v1322
        %vm1325 = vcmask 588800
        %v1327 = vsel %vm1325, %v1289, 0
        %v1330 = vsel %vm1325, %v1290, 0
        %v1333 = vsel %vm1325, %v1291, 0
        %v1336 = vsel %vm1325, %v1292, 0
        %v1339 = vsel %vm1325, %v1293, 0
        %v1342 = vsel %vm1325, %v1294, 0
        %v1345 = vsel %vm1325, %v1295, 0
        %v1348 = vsel %vm1325, %v1296, 0
        %v1351 = vsel %vm1325, %v1297, 0
        %v1354 = vsel %vm1325, %v1298, 0
        %v1357 = vsel %vm1325, %v1299, 0
        %v1360 = vsel %vm1325, %v1300, 0
        %v1363 = vsel %vm1325, %v1301, 0
        %v1366 = vsel %vm1325, %v1302, 0
        %v1369 = vsel %vm1325, %v1303, 0
        %v1372 = vsel %vm1325, %v1304, 0
        %v1375 = vsel %vm1325, %v1305, 0
        %v1378 = vsel %vm1325, %v1306, 0
        %v1381 = vsel %vm1325, %v1307, 0
        %v1384 = vsel %vm1325, %v1308, 0
        %1386 = vmatprep.subr.mxu0 0.0
        %1387 = vmatpush1.msra.mxu0 %v1309
        %1388 = vmatprep.subr.mxu0 0.0
        %1389 = vmatpush1.msra.mxu0 %v1310
        %1390 = vmatprep.subr.mxu0 0.0
        %1391 = vmatpush1.msra.mxu0 %v1311
        %1392 = vmatprep.subr.mxu0 0.0
        %1393 = vmatpush1.msra.mxu0 %v1312
        %1394 = vmatprep.subr.mxu0 0.0
        %1395 = vmatpush1.msra.mxu0 %v1313
        %1396 = vmatprep.subr.mxu0 0.0
        %1397 = vmatpush1.msra.mxu0 %v1314
        %1398 = vmatprep.subr.mxu0 0.0
        %1399 = vmatpush1.msra.mxu0 %v1315
        %1400 = vmatprep.subr.mxu0 0.0
        %1401 = vmatpush1.msra.mxu0 %v1316
        %1402 = vmatprep.subr.mxu0 0.0
        %1403 = vmatpush1.msra.mxu0 %v1317
        %1404 = vmatprep.subr.mxu0 0.0
        %1405 = vmatpush1.msra.mxu0 0.0
        %1406 = vmatprep.subr.mxu0 0.0
        %1407 = vmatpush1.msra.mxu0 0.0
        %1408 = vmatprep.subr.mxu0 0.0
        %1409 = vmatpush1.msra.mxu0 0.0
        %1410 = vmatprep.subr.mxu0 0.0
        %1411 = vmatpush1.msra.mxu0 0.0
        %1412 = vmatprep.subr.mxu0 0.0
        %1413 = vmatpush1.msra.mxu0 0.0
        %1414 = vmatprep.subr.mxu0 0.0
        %1415 = vmatpush1.msra.mxu0 0.0
        %1416 = vmatprep.subr.mxu0 0.0
        %1417 = vmatpush1.msra.mxu0 0.0
        %1418 = vmatprep.subr.mxu0 0.0
        %1419 = vmatpush1.msra.mxu0 0.0
        %1420 = vmatprep.subr.mxu0 0.0
        %1421 = vmatpush1.msra.mxu0 0.0
        %1422 = vmatprep.subr.mxu0 0.0
        %1423 = vmatpush1.msra.mxu0 0.0
        %1424 = vmatprep.subr.mxu0 0.0
        %1425 = vmatpush1.msra.mxu0 0.0
        %1426 = vmatprep.subr.mxu0 0.0
        %1427 = vmatpush1.msra.mxu0 0.0
        %1428 = vmatprep.subr.mxu0 0.0
        %1429 = vmatpush1.msra.mxu0 0.0
        %1430 = vmatprep.subr.mxu0 0.0
        %1431 = vmatpush1.msra.mxu0 0.0
        %1432 = vmatprep.subr.mxu0 0.0
        %1433 = vmatpush1.msra.mxu0 0.0
        %1434 = vmatprep.subr.mxu0 0.0
        %1435 = vmatpush1.msra.mxu0 0.0
        %1436 = vmatprep.subr.mxu0 0.0
        %1437 = vmatpush1.msra.mxu0 0.0
        %1438 = vmatprep.subr.mxu0 0.0
        %1439 = vmatpush1.msra.mxu0 0.0
        %1440 = vmatprep.subr.mxu0 0.0
        %1441 = vmatpush1.msra.mxu0 0.0
        %1442 = vmatprep.subr.mxu0 0.0
        %1443 = vmatpush1.msra.mxu0 0.0
        %1444 = vmatprep.subr.mxu0 0.0
        %1445 = vmatpush1.msra.mxu0 0.0
        %1446 = vmatprep.subr.mxu0 0.0
        %1447 = vmatpush1.msra.mxu0 0.0
        %1448 = vmatprep.subr.mxu0 0.0
        %1449 = vmatpush1.msra.mxu0 0.0
        %1450 = vmatprep.mubr.f32.mxu0 0.0
        %1451 = vmatmul.mubr.f32.gmra.mrb[0].mxu0 %v1327
        %v1452 = vpop.f32.mrb[0].mxu0
        %v1453 = vadd.f32 %v1323, %v1452
        %v1454 = vpop.f32.mrb[0].mxu0
        %1455 = vmatprep.mubr.f32.mxu0 0.0
        %1456 = vmatmul.mubr.f32.gmra.mrb[0].mxu0 %v1330
        %v1457 = vpop.f32.mrb[0].mxu0
        %v1458 = vadd.f32 %v1323, %v1457
        %v1459 = vpop.f32.mrb[0].mxu0
        %1460 = vmatprep.mubr.f32.mxu0 0.0
        %1461 = vmatmul.mubr.f32.gmra.mrb[0].mxu0 %v1333
        %v1462 = vpop.f32.mrb[0].mxu0
        %v1463 = vadd.f32 %v1323, %v1462
        %v1464 = vpop.f32.mrb[0].mxu0
        %1465 = vmatprep.mubr.f32.mxu0 0.0
        %1466 = vmatmul.mubr.f32.gmra.mrb[0].mxu0 %v1336
        %v1467 = vpop.f32.mrb[0].mxu0
        %v1468 = vadd.f32 %v1323, %v1467
        %v1469 = vpop.f32.mrb[0].mxu0
        %1470 = vmatprep.mubr.f32.mxu0 0.0
        %1471 = vmatmul.mubr.f32.gmra.mrb[0].mxu0 %v1339
        %v1472 = vpop.f32.mrb[0].mxu0
        %v1473 = vadd.f32 %v1323, %v1472
        %v1474 = vpop.f32.mrb[0].mxu0
        %1475 = vmatprep.mubr.f32.mxu0 0.0
        %1476 = vmatmul.mubr.f32.gmra.mrb[0].mxu0 %v1342
        %v1477 = vpop.f32.mrb[0].mxu0
        %v1478 = vadd.f32 %v1323, %v1477
        %v1479 = vpop.f32.mrb[0].mxu0
        %1480 = vmatprep.mubr.f32.mxu0 0.0
        %1481 = vmatmul.mubr.f32.gmra.mrb[0].mxu0 %v1345
        %v1482 = vpop.f32.mrb[0].mxu0
        %v1483 = vadd.f32 %v1323, %v1482
        %v1484 = vpop.f32.mrb[0].mxu0
        %1485 = vmatprep.mubr.f32.mxu0 0.0
        %1486 = vmatmul.mubr.f32.gmra.mrb[0].mxu0 %v1348
        %v1487 = vpop.f32.mrb[0].mxu0
        %v1488 = vadd.f32 %v1323, %v1487
        %v1489 = vpop.f32.mrb[0].mxu0
        %1490 = vmatprep.mubr.f32.mxu0 0.0
        %1491 = vmatmul.mubr.f32.gmra.mrb[0].mxu0 %v1351
        %v1492 = vpop.f32.mrb[0].mxu0
        %v1493 = vadd.f32 %v1323, %v1492
        %v1494 = vpop.f32.mrb[0].mxu0
        %1495 = vmatprep.mubr.f32.mxu0 0.0
        %1496 = vmatmul.mubr.f32.gmra.mrb[0].mxu0 %v1354
        %v1497 = vpop.f32.mrb[0].mxu0
        %v1498 = vadd.f32 %v1323, %v1497
        %v1499 = vpop.f32.mrb[0].mxu0
        %1500 = vmatprep.mubr.f32.mxu0 0.0
        %1501 = vmatmul.mubr.f32.gmra.mrb[0].mxu0 %v1357
        %v1502 = vpop.f32.mrb[0].mxu0
        %v1503 = vadd.f32 %v1323, %v1502
        %v1504 = vpop.f32.mrb[0].mxu0
        %1505 = vmatprep.mubr.f32.mxu0 0.0
        %1506 = vmatmul.mubr.f32.gmra.mrb[0].mxu0 %v1360
        %v1507 = vpop.f32.mrb[0].mxu0
        %v1508 = vadd.f32 %v1323, %v1507
        %v1509 = vpop.f32.mrb[0].mxu0
        %1510 = vmatprep.mubr.f32.mxu0 0.0
        %1511 = vmatmul.mubr.f32.gmra.mrb[0].mxu0 %v1363
        %v1512 = vpop.f32.mrb[0].mxu0
        %v1513 = vadd.f32 %v1323, %v1512
        %v1514 = vpop.f32.mrb[0].mxu0
        %1515 = vmatprep.mubr.f32.mxu0 0.0
        %1516 = vmatmul.mubr.f32.gmra.mrb[0].mxu0 %v1366
        %v1517 = vpop.f32.mrb[0].mxu0
        %v1518 = vadd.f32 %v1323, %v1517
        %v1519 = vpop.f32.mrb[0].mxu0
        %1520 = vmatprep.mubr.f32.mxu0 0.0
        %1521 = vmatmul.mubr.f32.gmra.mrb[0].mxu0 %v1369
        %v1522 = vpop.f32.mrb[0].mxu0
        %v1523 = vadd.f32 %v1323, %v1522
        %v1524 = vpop.f32.mrb[0].mxu0
        %1525 = vmatprep.mubr.f32.mxu0 0.0
        %1526 = vmatmul.mubr.f32.gmra.mrb[0].mxu0 %v1372
        %v1527 = vpop.f32.mrb[0].mxu0
        %v1528 = vadd.f32 %v1323, %v1527
        %v1529 = vpop.f32.mrb[0].mxu0
        %1530 = vmatprep.mubr.f32.mxu0 0.0
        %1531 = vmatmul.mubr.f32.gmra.mrb[0].mxu0 %v1375
        %v1532 = vpop.f32.mrb[0].mxu0
        %v1533 = vadd.f32 %v1323, %v1532
        %v1534 = vpop.f32.mrb[0].mxu0
        %1535 = vmatprep.mubr.f32.mxu0 0.0
        %1536 = vmatmul.mubr.f32.gmra.mrb[0].mxu0 %v1378
        %v1537 = vpop.f32.mrb[0].mxu0
        %v1538 = vadd.f32 %v1323, %v1537
        %v1539 = vpop.f32.mrb[0].mxu0
        %1540 = vmatprep.mubr.f32.mxu0 0.0
        %1541 = vmatmul.mubr.f32.gmra.mrb[0].mxu0 %v1381
        %v1542 = vpop.f32.mrb[0].mxu0
        %v1543 = vadd.f32 %v1323, %v1542
        %v1544 = vpop.f32.mrb[0].mxu0
        %1545 = vmatprep.mubr.f32.mxu0 0.0
        %1546 = vmatmul.mubr.f32.gmra.mrb[0].mxu0 %v1384
        %v1547 = vpop.f32.mrb[0].mxu0
        %v1548 = vadd.f32 %v1323, %v1547
        %v1549 = vpop.f32.mrb[0].mxu0
        %1550 = vdwg.mxu0
        %v1551 = vmax.f32 %v1453, 0.0
        %v1552 = vmax.f32 %v1458, 0.0
        %v1553 = vmax.f32 %v1463, 0.0
        %v1554 = vmax.f32 %v1468, 0.0
        %v1555 = vmax.f32 %v1473, 0.0
        %v1556 = vmax.f32 %v1478, 0.0
        %v1557 = vmax.f32 %v1483, 0.0
        %v1558 = vmax.f32 %v1488, 0.0
        %v1559 = vmax.f32 %v1493, 0.0
        %v1560 = vmax.f32 %v1498, 0.0
        %v1561 = vmax.f32 %v1503, 0.0
        %v1562 = vmax.f32 %v1508, 0.0
        %v1563 = vmax.f32 %v1513, 0.0
        %v1564 = vmax.f32 %v1518, 0.0
        %v1565 = vmax.f32 %v1523, 0.0
        %v1566 = vmax.f32 %v1528, 0.0
        %v1567 = vmax.f32 %v1533, 0.0
        %v1568 = vmax.f32 %v1538, 0.0
        %v1569 = vmax.f32 %v1543, 0.0
        %v1570 = vmax.f32 %v1548, 0.0
        %1571 = vst.msk [vmem:[#allocation2 + $0x1] sm:$0xff] %vm1141, %v1551
        %1572 = vst.msk [vmem:[#allocation2 + $0x9] sm:$0xff] %vm1141, %v1552
        %1573 = vst.msk [vmem:[#allocation2 + $0x19] sm:$0xff] %vm1141, %v1553
        %1574 = vst.msk [vmem:[#allocation2 + $0x21] sm:$0xff] %vm1141, %v1554
        %1575 = vst.msk [vmem:[#allocation2 + $0x31] sm:$0xff] %vm1141, %v1555
        %1576 = vst.msk [vmem:[#allocation2 + $0x39] sm:$0xff] %vm1141, %v1556
        %1577 = vst.msk [vmem:[#allocation2 + $0x49] sm:$0xff] %vm1141, %v1557
        %1578 = vst.msk [vmem:[#allocation2 + $0x51] sm:$0xff] %vm1141, %v1558
        %1579 = vst.msk [vmem:[#allocation2 + $0x61] sm:$0xff] %vm1141, %v1559
        %1580 = vst.msk [vmem:[#allocation2 + $0x69] sm:$0xff] %vm1141, %v1560
        %1581 = vst.msk [vmem:[#allocation2 + $0x79] sm:$0xff] %vm1141, %v1561
        %1582 = vst.msk [vmem:[#allocation2 + $0x81] sm:$0xff] %vm1141, %v1562
        %1583 = vst.msk [vmem:[#allocation2 + $0x91] sm:$0xff] %vm1141, %v1563
        %1584 = vst.msk [vmem:[#allocation2 + $0x99] sm:$0xff] %vm1141, %v1564
        %1585 = vst.msk [vmem:[#allocation2 + $0xa9] sm:$0xff] %vm1141, %v1565
        %1586 = vst.msk [vmem:[#allocation2 + $0xb1] sm:$0xff] %vm1141, %v1566
        %1587 = vst.msk [vmem:[#allocation2 + $0xc1] sm:$0xff] %vm1141, %v1567
        %1588 = vst.msk [vmem:[#allocation2 + $0xc9] sm:$0xff] %vm1141, %v1568
        %1589 = vst.msk [vmem:[#allocation2 + $0xd9] sm:$0xff] %vm1141, %v1569
        %1590 = vst.msk [vmem:[#allocation2 + $0xe1] sm:$0xff] %vm1141, %v1570
        %vm1591 = vcmask 57344
        %1592 = vst.msk [vmem:[#allocation2] sm:$0x1] %vm1591, 0.0
        %1593 = vst.msk [vmem:[#allocation2 + $0x18] sm:$0x1] %vm1591, 0.0
        %1594 = vst.msk [vmem:[#allocation2 + $0x30] sm:$0x1] %vm1591, 0.0
        %1595 = vst.msk [vmem:[#allocation2 + $0x48] sm:$0x1] %vm1591, 0.0
        %1596 = vst.msk [vmem:[#allocation2 + $0x60] sm:$0x1] %vm1591, 0.0
        %1597 = vst.msk [vmem:[#allocation2 + $0x78] sm:$0x1] %vm1591, 0.0
        %1598 = vst.msk [vmem:[#allocation2 + $0x90] sm:$0x1] %vm1591, 0.0
        %1599 = vst.msk [vmem:[#allocation2 + $0xa8] sm:$0x1] %vm1591, 0.0
        %1600 = vst.msk [vmem:[#allocation2 + $0xc0] sm:$0x1] %vm1591, 0.0
        %1601 = vst.msk [vmem:[#allocation2 + $0xd8] sm:$0x1] %vm1591, 0.0
        %1602 = vst.msk [vmem:[#allocation2 + $0x11] sm:$0x1] %vm1591, 0.0
        %1603 = vst.msk [vmem:[#allocation2 + $0x29] sm:$0x1] %vm1591, 0.0
        %1604 = vst.msk [vmem:[#allocation2 + $0x41] sm:$0x1] %vm1591, 0.0
        %1605 = vst.msk [vmem:[#allocation2 + $0x59] sm:$0x1] %vm1591, 0.0
        %1606 = vst.msk [vmem:[#allocation2 + $0x71] sm:$0x1] %vm1591, 0.0
        %1607 = vst.msk [vmem:[#allocation2 + $0x89] sm:$0x1] %vm1591, 0.0
        %1608 = vst.msk [vmem:[#allocation2 + $0xa1] sm:$0x1] %vm1591, 0.0
        %1609 = vst.msk [vmem:[#allocation2 + $0xb9] sm:$0x1] %vm1591, 0.0
        %1610 = vst.msk [vmem:[#allocation2 + $0xd1] sm:$0x1] %vm1591, 0.0
        %1611 = vst.msk [vmem:[#allocation2 + $0xe9] sm:$0x1] %vm1591, 0.0
        %p1612 = scmp.eq.s32.totalorder %s29, 0
        // Predicated region
        $region61: #{basic_block_forward.1} parent=39 // pred_check
          %p1613 = pneg %p1612
        $region62: #{basic_block_forward.1} parent=39 // pred_check_branch
          %1615 = sbr.rel (%p1613) target = $region64
        $region63: #{basic_block_forward.1} parent=39 // pred_region
          %1616 = vst.msk [vmem:[#allocation2] sm:$0xff] %vm1141, 0.0
          %1617 = vst.msk [vmem:[#allocation2 + $0x8] sm:$0xff] %vm1141, 0.0
          %vm1618 = vcmask 58368
          %1619 = vst.msk [vmem:[#allocation2 + $0x10] sm:$0x3] %vm1618, 0.0
        $region64: #{basic_block_forward.1} parent=39 // pred_fallthru
          _
        %p1620 = scmp.eq.s32.totalorder %s29, 1
        // Predicated region
        $region65: #{basic_block_forward.1} parent=39 // pred_check
          %p1621 = pneg %p1620
        $region66: #{basic_block_forward.1} parent=39 // pred_check_branch
          %1623 = sbr.rel (%p1621) target = $region68
        $region67: #{basic_block_forward.1} parent=39 // pred_region
          %s1624 = scalar_lea.vmem [#allocation2], 216
          %1625 = vst.msk [vmem:[%s1624] sm:$0xff] %vm1141, 0.0
          %1626 = vst.msk [vmem:[%s1624 + $0x8] sm:$0xff] %vm1141, 0.0
          %vm1627 = vcmask 58368
          %1628 = vst.msk [vmem:[%s1624 + $0x10] sm:$0x3] %vm1627, 0.0
        $region68: #{basic_block_forward.1} parent=39 // pred_fallthru
          _
        %v1629 = vld [vmem:[#allocation2] sm:$0xff]
        %v1630 = vld [vmem:[#allocation2 + $0x8] sm:$0xff]
        %v1631 = vld [vmem:[#allocation2 + $0x18] sm:$0xff]
        %v1632 = vld [vmem:[#allocation2 + $0x20] sm:$0xff]
        %v1633 = vld [vmem:[#allocation2 + $0x30] sm:$0xff]
        %v1634 = vld [vmem:[#allocation2 + $0x38] sm:$0xff]
        %v1635 = vld [vmem:[#allocation2 + $0x48] sm:$0xff]
        %v1636 = vld [vmem:[#allocation2 + $0x50] sm:$0xff]
        %v1637 = vld [vmem:[#allocation2 + $0x60] sm:$0xff]
        %v1638 = vld [vmem:[#allocation2 + $0x68] sm:$0xff]
        %v1639 = vld [vmem:[#allocation2 + $0x78] sm:$0xff]
        %v1640 = vld [vmem:[#allocation2 + $0x80] sm:$0xff]
        %v1641 = vld [vmem:[#allocation2 + $0x90] sm:$0xff]
        %v1642 = vld [vmem:[#allocation2 + $0x98] sm:$0xff]
        %v1643 = vld [vmem:[#allocation2 + $0xa8] sm:$0xff]
        %v1644 = vld [vmem:[#allocation2 + $0xb0] sm:$0xff]
        %v1645 = vld [vmem:[#allocation2 + $0x1] sm:$0xff]
        %v1646 = vld [vmem:[#allocation2 + $0x9] sm:$0xff]
        %v1647 = vld [vmem:[#allocation2 + $0x19] sm:$0xff]
        %v1648 = vld [vmem:[#allocation2 + $0x21] sm:$0xff]
        %v1649 = vld [vmem:[#allocation2 + $0x31] sm:$0xff]
        %v1650 = vld [vmem:[#allocation2 + $0x39] sm:$0xff]
        %v1651 = vld [vmem:[#allocation2 + $0x49] sm:$0xff]
        %v1652 = vld [vmem:[#allocation2 + $0x51] sm:$0xff]
        %v1653 = vld [vmem:[#allocation2 + $0x61] sm:$0xff]
        %v1654 = vld [vmem:[#allocation2 + $0x69] sm:$0xff]
        %v1655 = vld [vmem:[#allocation2 + $0x79] sm:$0xff]
        %v1656 = vld [vmem:[#allocation2 + $0x81] sm:$0xff]
        %v1657 = vld [vmem:[#allocation2 + $0x91] sm:$0xff]
        %v1658 = vld [vmem:[#allocation2 + $0x99] sm:$0xff]
        %v1659 = vld [vmem:[#allocation2 + $0xa9] sm:$0xff]
        %v1660 = vld [vmem:[#allocation2 + $0xb1] sm:$0xff]
        %v1661 = vld [vmem:[#allocation2 + $0x2] sm:$0xff]
        %v1662 = vld [vmem:[#allocation2 + $0xa] sm:$0xff]
        %v1663 = vld [vmem:[#allocation2 + $0x1a] sm:$0xff]
        %v1664 = vld [vmem:[#allocation2 + $0x22] sm:$0xff]
        %v1665 = vld [vmem:[#allocation2 + $0x32] sm:$0xff]
        %v1666 = vld [vmem:[#allocation2 + $0x3a] sm:$0xff]
        %v1667 = vld [vmem:[#allocation2 + $0x4a] sm:$0xff]
        %v1668 = vld [vmem:[#allocation2 + $0x52] sm:$0xff]
        %v1669 = vld [vmem:[#allocation2 + $0x62] sm:$0xff]
        %v1670 = vld [vmem:[#allocation2 + $0x6a] sm:$0xff]
        %v1671 = vld [vmem:[#allocation2 + $0x7a] sm:$0xff]
        %v1672 = vld [vmem:[#allocation2 + $0x82] sm:$0xff]
        %v1673 = vld [vmem:[#allocation2 + $0x92] sm:$0xff]
        %v1674 = vld [vmem:[#allocation2 + $0x9a] sm:$0xff]
        %v1675 = vld [vmem:[#allocation2 + $0xaa] sm:$0xff]
        %v1676 = vld [vmem:[#allocation2 + $0xb2] sm:$0xff]
        %s1677 = scalar_lea.vmem [#allocation2], 24
        %v1678 = vld [vmem:[%s1677] sm:$0xff]
        %v1679 = vld [vmem:[%s1677 + $0x8] sm:$0xff]
        %v1680 = vld [vmem:[%s1677 + $0x18] sm:$0xff]
        %v1681 = vld [vmem:[%s1677 + $0x20] sm:$0xff]
        %v1682 = vld [vmem:[%s1677 + $0x30] sm:$0xff]
        %v1683 = vld [vmem:[%s1677 + $0x38] sm:$0xff]
        %v1684 = vld [vmem:[%s1677 + $0x48] sm:$0xff]
        %v1685 = vld [vmem:[%s1677 + $0x50] sm:$0xff]
        %v1686 = vld [vmem:[%s1677 + $0x60] sm:$0xff]
        %v1687 = vld [vmem:[%s1677 + $0x68] sm:$0xff]
        %v1688 = vld [vmem:[%s1677 + $0x78] sm:$0xff]
        %v1689 = vld [vmem:[%s1677 + $0x80] sm:$0xff]
        %v1690 = vld [vmem:[%s1677 + $0x90] sm:$0xff]
        %v1691 = vld [vmem:[%s1677 + $0x98] sm:$0xff]
        %v1692 = vld [vmem:[%s1677 + $0xa8] sm:$0xff]
        %v1693 = vld [vmem:[%s1677 + $0xb0] sm:$0xff]
        %v1694 = vld [vmem:[%s1677 + $0x1] sm:$0xff]
        %v1695 = vld [vmem:[%s1677 + $0x9] sm:$0xff]
        %v1696 = vld [vmem:[%s1677 + $0x19] sm:$0xff]
        %v1697 = vld [vmem:[%s1677 + $0x21] sm:$0xff]
        %v1698 = vld [vmem:[%s1677 + $0x31] sm:$0xff]
        %v1699 = vld [vmem:[%s1677 + $0x39] sm:$0xff]
        %v1700 = vld [vmem:[%s1677 + $0x49] sm:$0xff]
        %v1701 = vld [vmem:[%s1677 + $0x51] sm:$0xff]
        %v1702 = vld [vmem:[%s1677 + $0x61] sm:$0xff]
        %v1703 = vld [vmem:[%s1677 + $0x69] sm:$0xff]
        %v1704 = vld [vmem:[%s1677 + $0x79] sm:$0xff]
        %v1705 = vld [vmem:[%s1677 + $0x81] sm:$0xff]
        %v1706 = vld [vmem:[%s1677 + $0x91] sm:$0xff]
        %v1707 = vld [vmem:[%s1677 + $0x99] sm:$0xff]
        %v1708 = vld [vmem:[%s1677 + $0xa9] sm:$0xff]
        %v1709 = vld [vmem:[%s1677 + $0xb1] sm:$0xff]
        %v1710 = vld [vmem:[%s1677 + $0x2] sm:$0xff]
        %v1711 = vld [vmem:[%s1677 + $0xa] sm:$0xff]
        %v1712 = vld [vmem:[%s1677 + $0x1a] sm:$0xff]
        %v1713 = vld [vmem:[%s1677 + $0x22] sm:$0xff]
        %v1714 = vld [vmem:[%s1677 + $0x32] sm:$0xff]
        %v1715 = vld [vmem:[%s1677 + $0x3a] sm:$0xff]
        %v1716 = vld [vmem:[%s1677 + $0x4a] sm:$0xff]
        %v1717 = vld [vmem:[%s1677 + $0x52] sm:$0xff]
        %v1718 = vld [vmem:[%s1677 + $0x62] sm:$0xff]
        %v1719 = vld [vmem:[%s1677 + $0x6a] sm:$0xff]
        %v1720 = vld [vmem:[%s1677 + $0x7a] sm:$0xff]
        %v1721 = vld [vmem:[%s1677 + $0x82] sm:$0xff]
        %v1722 = vld [vmem:[%s1677 + $0x92] sm:$0xff]
        %v1723 = vld [vmem:[%s1677 + $0x9a] sm:$0xff]
        %v1724 = vld [vmem:[%s1677 + $0xaa] sm:$0xff]
        %v1725 = vld [vmem:[%s1677 + $0xb2] sm:$0xff]
        %s1726 = scalar_lea.vmem [#allocation2], 48
        %v1727 = vld [vmem:[%s1726] sm:$0xff]
        %v1728 = vld [vmem:[%s1726 + $0x8] sm:$0xff]
        %v1729 = vld [vmem:[%s1726 + $0x18] sm:$0xff]
        %v1730 = vld [vmem:[%s1726 + $0x20] sm:$0xff]
        %v1731 = vld [vmem:[%s1726 + $0x30] sm:$0xff]
        %v1732 = vld [vmem:[%s1726 + $0x38] sm:$0xff]
        %v1733 = vld [vmem:[%s1726 + $0x48] sm:$0xff]
        %v1734 = vld [vmem:[%s1726 + $0x50] sm:$0xff]
        %v1735 = vld [vmem:[%s1726 + $0x60] sm:$0xff]
        %v1736 = vld [vmem:[%s1726 + $0x68] sm:$0xff]
        %v1737 = vld [vmem:[%s1726 + $0x78] sm:$0xff]
        %v1738 = vld [vmem:[%s1726 + $0x80] sm:$0xff]
        %v1739 = vld [vmem:[%s1726 + $0x90] sm:$0xff]
        %v1740 = vld [vmem:[%s1726 + $0x98] sm:$0xff]
        %v1741 = vld [vmem:[%s1726 + $0xa8] sm:$0xff]
        %v1742 = vld [vmem:[%s1726 + $0xb0] sm:$0xff]
        %v1743 = vld [vmem:[%s1726 + $0x1] sm:$0xff]
        %v1744 = vld [vmem:[%s1726 + $0x9] sm:$0xff]
        %v1745 = vld [vmem:[%s1726 + $0x19] sm:$0xff]
        %v1746 = vld [vmem:[%s1726 + $0x21] sm:$0xff]
        %v1747 = vld [vmem:[%s1726 + $0x31] sm:$0xff]
        %v1748 = vld [vmem:[%s1726 + $0x39] sm:$0xff]
        %v1749 = vld [vmem:[%s1726 + $0x49] sm:$0xff]
        %v1750 = vld [vmem:[%s1726 + $0x51] sm:$0xff]
        %v1751 = vld [vmem:[%s1726 + $0x61] sm:$0xff]
        %v1752 = vld [vmem:[%s1726 + $0x69] sm:$0xff]
        %v1753 = vld [vmem:[%s1726 + $0x79] sm:$0xff]
        %v1754 = vld [vmem:[%s1726 + $0x81] sm:$0xff]
        %v1755 = vld [vmem:[%s1726 + $0x91] sm:$0xff]
        %v1756 = vld [vmem:[%s1726 + $0x99] sm:$0xff]
        %v1757 = vld [vmem:[%s1726 + $0xa9] sm:$0xff]
        %v1758 = vld [vmem:[%s1726 + $0xb1] sm:$0xff]
        %v1759 = vld [vmem:[%s1726 + $0x2] sm:$0xff]
        %v1760 = vld [vmem:[%s1726 + $0xa] sm:$0xff]
        %v1761 = vld [vmem:[%s1726 + $0x1a] sm:$0xff]
        %v1762 = vld [vmem:[%s1726 + $0x22] sm:$0xff]
        %v1763 = vld [vmem:[%s1726 + $0x32] sm:$0xff]
        %v1764 = vld [vmem:[%s1726 + $0x3a] sm:$0xff]
        %v1765 = vld [vmem:[%s1726 + $0x4a] sm:$0xff]
        %v1766 = vld [vmem:[%s1726 + $0x52] sm:$0xff]
        %v1767 = vld [vmem:[%s1726 + $0x62] sm:$0xff]
        %v1768 = vld [vmem:[%s1726 + $0x6a] sm:$0xff]
        %v1769 = vld [vmem:[%s1726 + $0x7a] sm:$0xff]
        %v1770 = vld [vmem:[%s1726 + $0x82] sm:$0xff]
        %v1771 = vld [vmem:[%s1726 + $0x92] sm:$0xff]
        %v1772 = vld [vmem:[%s1726 + $0x9a] sm:$0xff]
        %v1773 = vld [vmem:[%s1726 + $0xaa] sm:$0xff]
        %v1774 = vld [vmem:[%s1726 + $0xb2] sm:$0xff]
        %v1775 = vld [vmem:[%s440 + $0x1] sm:$0xff]
        %v1776 = vld [vmem:[%s440 + $0x9] sm:$0xff]
        %v1777 = vld [vmem:[%s440 + $0x19] sm:$0xff]
        %v1778 = vld [vmem:[%s440 + $0x21] sm:$0xff]
        %v1779 = vld [vmem:[%s440 + $0x31] sm:$0xff]
        %v1780 = vld [vmem:[%s440 + $0x39] sm:$0xff]
        %v1781 = vld [vmem:[%s440 + $0x49] sm:$0xff]
        %v1782 = vld [vmem:[%s440 + $0x51] sm:$0xff]
        %v1783 = vld [vmem:[%s440 + $0x61] sm:$0xff]
        %v1784 = vld [vmem:[%s440 + $0x69] sm:$0xff]
        %v1785 = vld [vmem:[%s440 + $0x79] sm:$0xff]
        %v1786 = vld [vmem:[%s440 + $0x81] sm:$0xff]
        %v1787 = vld [vmem:[%s440 + $0x91] sm:$0xff]
        %v1788 = vld [vmem:[%s440 + $0x99] sm:$0xff]
        %v1789 = vld [vmem:[%s440 + $0xa9] sm:$0xff]
        %v1790 = vld [vmem:[%s440 + $0xb1] sm:$0xff]
        %1807 = vrot.lane.b32.xlu0 %v1645, 8
        %v1808 = vpop.permute.xlu0 %1807
        %1809 = vrot.lane.b32.xlu0 %v1646, 8
        %v1810 = vpop.permute.xlu0 %1809
        %1811 = vrot.lane.b32.xlu0 %v1647, 8
        %v1812 = vpop.permute.xlu0 %1811
        %1813 = vrot.lane.b32.xlu0 %v1648, 8
        %v1814 = vpop.permute.xlu0 %1813
        %1815 = vrot.lane.b32.xlu0 %v1649, 8
        %v1816 = vpop.permute.xlu0 %1815
        %1817 = vrot.lane.b32.xlu0 %v1650, 8
        %v1818 = vpop.permute.xlu0 %1817
        %1819 = vrot.lane.b32.xlu0 %v1651, 8
        %v1820 = vpop.permute.xlu0 %1819
        %1821 = vrot.lane.b32.xlu0 %v1652, 8
        %v1822 = vpop.permute.xlu0 %1821
        %1823 = vrot.lane.b32.xlu0 %v1653, 8
        %v1824 = vpop.permute.xlu0 %1823
        %1825 = vrot.lane.b32.xlu0 %v1654, 8
        %v1826 = vpop.permute.xlu0 %1825
        %1827 = vrot.lane.b32.xlu0 %v1655, 8
        %v1828 = vpop.permute.xlu0 %1827
        %1829 = vrot.lane.b32.xlu0 %v1656, 8
        %v1830 = vpop.permute.xlu0 %1829
        %1831 = vrot.lane.b32.xlu0 %v1657, 8
        %v1832 = vpop.permute.xlu0 %1831
        %1833 = vrot.lane.b32.xlu0 %v1658, 8
        %v1834 = vpop.permute.xlu0 %1833
        %1835 = vrot.lane.b32.xlu0 %v1659, 8
        %v1836 = vpop.permute.xlu0 %1835
        %1837 = vrot.lane.b32.xlu0 %v1660, 8
        %v1838 = vpop.permute.xlu0 %1837
        %1871 = vrot.lane.b32.xlu0 %v1661, 16
        %v1872 = vpop.permute.xlu0 %1871
        %1873 = vrot.lane.b32.xlu0 %v1662, 16
        %v1874 = vpop.permute.xlu0 %1873
        %1875 = vrot.lane.b32.xlu0 %v1663, 16
        %v1876 = vpop.permute.xlu0 %1875
        %1877 = vrot.lane.b32.xlu0 %v1664, 16
        %v1878 = vpop.permute.xlu0 %1877
        %1879 = vrot.lane.b32.xlu0 %v1665, 16
        %v1880 = vpop.permute.xlu0 %1879
        %1881 = vrot.lane.b32.xlu0 %v1666, 16
        %v1882 = vpop.permute.xlu0 %1881
        %1883 = vrot.lane.b32.xlu0 %v1667, 16
        %v1884 = vpop.permute.xlu0 %1883
        %1885 = vrot.lane.b32.xlu0 %v1668, 16
        %v1886 = vpop.permute.xlu0 %1885
        %1887 = vrot.lane.b32.xlu0 %v1669, 16
        %v1888 = vpop.permute.xlu0 %1887
        %1889 = vrot.lane.b32.xlu0 %v1670, 16
        %v1890 = vpop.permute.xlu0 %1889
        %1891 = vrot.lane.b32.xlu0 %v1671, 16
        %v1892 = vpop.permute.xlu0 %1891
        %1893 = vrot.lane.b32.xlu0 %v1672, 16
        %v1894 = vpop.permute.xlu0 %1893
        %1895 = vrot.lane.b32.xlu0 %v1673, 16
        %v1896 = vpop.permute.xlu0 %1895
        %1897 = vrot.lane.b32.xlu0 %v1674, 16
        %v1898 = vpop.permute.xlu0 %1897
        %1899 = vrot.lane.b32.xlu0 %v1675, 16
        %v1900 = vpop.permute.xlu0 %1899
        %1901 = vrot.lane.b32.xlu0 %v1676, 16
        %v1902 = vpop.permute.xlu0 %1901
        %1935 = vrot.lane.b32.xlu0 %v1678, 24
        %v1936 = vpop.permute.xlu0 %1935
        %1937 = vrot.lane.b32.xlu0 %v1679, 24
        %v1938 = vpop.permute.xlu0 %1937
        %1939 = vrot.lane.b32.xlu0 %v1680, 24
        %v1940 = vpop.permute.xlu0 %1939
        %1941 = vrot.lane.b32.xlu0 %v1681, 24
        %v1942 = vpop.permute.xlu0 %1941
        %1943 = vrot.lane.b32.xlu0 %v1682, 24
        %v1944 = vpop.permute.xlu0 %1943
        %1945 = vrot.lane.b32.xlu0 %v1683, 24
        %v1946 = vpop.permute.xlu0 %1945
        %1947 = vrot.lane.b32.xlu0 %v1684, 24
        %v1948 = vpop.permute.xlu0 %1947
        %1949 = vrot.lane.b32.xlu0 %v1685, 24
        %v1950 = vpop.permute.xlu0 %1949
        %1951 = vrot.lane.b32.xlu0 %v1686, 24
        %v1952 = vpop.permute.xlu0 %1951
        %1953 = vrot.lane.b32.xlu0 %v1687, 24
        %v1954 = vpop.permute.xlu0 %1953
        %1955 = vrot.lane.b32.xlu0 %v1688, 24
        %v1956 = vpop.permute.xlu0 %1955
        %1957 = vrot.lane.b32.xlu0 %v1689, 24
        %v1958 = vpop.permute.xlu0 %1957
        %1959 = vrot.lane.b32.xlu0 %v1690, 24
        %v1960 = vpop.permute.xlu0 %1959
        %1961 = vrot.lane.b32.xlu0 %v1691, 24
        %v1962 = vpop.permute.xlu0 %1961
        %1963 = vrot.lane.b32.xlu0 %v1692, 24
        %v1964 = vpop.permute.xlu0 %1963
        %1965 = vrot.lane.b32.xlu0 %v1693, 24
        %v1966 = vpop.permute.xlu0 %1965
        %1999 = vrot.lane.b32.xlu0 %v1694, 32
        %v2000 = vpop.permute.xlu0 %1999
        %2001 = vrot.lane.b32.xlu0 %v1695, 32
        %v2002 = vpop.permute.xlu0 %2001
        %2003 = vrot.lane.b32.xlu0 %v1696, 32
        %v2004 = vpop.permute.xlu0 %2003
        %2005 = vrot.lane.b32.xlu0 %v1697, 32
        %v2006 = vpop.permute.xlu0 %2005
        %2007 = vrot.lane.b32.xlu0 %v1698, 32
        %v2008 = vpop.permute.xlu0 %2007
        %2009 = vrot.lane.b32.xlu0 %v1699, 32
        %v2010 = vpop.permute.xlu0 %2009
        %2011 = vrot.lane.b32.xlu0 %v1700, 32
        %v2012 = vpop.permute.xlu0 %2011
        %2013 = vrot.lane.b32.xlu0 %v1701, 32
        %v2014 = vpop.permute.xlu0 %2013
        %2015 = vrot.lane.b32.xlu0 %v1702, 32
        %v2016 = vpop.permute.xlu0 %2015
        %2017 = vrot.lane.b32.xlu0 %v1703, 32
        %v2018 = vpop.permute.xlu0 %2017
        %2019 = vrot.lane.b32.xlu0 %v1704, 32
        %v2020 = vpop.permute.xlu0 %2019
        %2021 = vrot.lane.b32.xlu0 %v1705, 32
        %v2022 = vpop.permute.xlu0 %2021
        %2023 = vrot.lane.b32.xlu0 %v1706, 32
        %v2024 = vpop.permute.xlu0 %2023
        %2025 = vrot.lane.b32.xlu0 %v1707, 32
        %v2026 = vpop.permute.xlu0 %2025
        %2027 = vrot.lane.b32.xlu0 %v1708, 32
        %v2028 = vpop.permute.xlu0 %2027
        %2029 = vrot.lane.b32.xlu0 %v1709, 32
        %v2030 = vpop.permute.xlu0 %2029
        %2063 = vrot.lane.b32.xlu0 %v1710, 40
        %v2064 = vpop.permute.xlu0 %2063
        %2065 = vrot.lane.b32.xlu0 %v1711, 40
        %v2066 = vpop.permute.xlu0 %2065
        %2067 = vrot.lane.b32.xlu0 %v1712, 40
        %v2068 = vpop.permute.xlu0 %2067
        %2069 = vrot.lane.b32.xlu0 %v1713, 40
        %v2070 = vpop.permute.xlu0 %2069
        %2071 = vrot.lane.b32.xlu0 %v1714, 40
        %v2072 = vpop.permute.xlu0 %2071
        %2073 = vrot.lane.b32.xlu0 %v1715, 40
        %v2074 = vpop.permute.xlu0 %2073
        %2075 = vrot.lane.b32.xlu0 %v1716, 40
        %v2076 = vpop.permute.xlu0 %2075
        %2077 = vrot.lane.b32.xlu0 %v1717, 40
        %v2078 = vpop.permute.xlu0 %2077
        %2079 = vrot.lane.b32.xlu0 %v1718, 40
        %v2080 = vpop.permute.xlu0 %2079
        %2081 = vrot.lane.b32.xlu0 %v1719, 40
        %v2082 = vpop.permute.xlu0 %2081
        %2083 = vrot.lane.b32.xlu0 %v1720, 40
        %v2084 = vpop.permute.xlu0 %2083
        %2085 = vrot.lane.b32.xlu0 %v1721, 40
        %v2086 = vpop.permute.xlu0 %2085
        %2087 = vrot.lane.b32.xlu0 %v1722, 40
        %v2088 = vpop.permute.xlu0 %2087
        %2089 = vrot.lane.b32.xlu0 %v1723, 40
        %v2090 = vpop.permute.xlu0 %2089
        %2091 = vrot.lane.b32.xlu0 %v1724, 40
        %v2092 = vpop.permute.xlu0 %2091
        %2093 = vrot.lane.b32.xlu0 %v1725, 40
        %v2094 = vpop.permute.xlu0 %2093
        %2127 = vrot.lane.b32.xlu0 %v1727, 48
        %v2128 = vpop.permute.xlu0 %2127
        %2129 = vrot.lane.b32.xlu0 %v1728, 48
        %v2130 = vpop.permute.xlu0 %2129
        %2131 = vrot.lane.b32.xlu0 %v1729, 48
        %v2132 = vpop.permute.xlu0 %2131
        %2133 = vrot.lane.b32.xlu0 %v1730, 48
        %v2134 = vpop.permute.xlu0 %2133
        %2135 = vrot.lane.b32.xlu0 %v1731, 48
        %v2136 = vpop.permute.xlu0 %2135
        %2137 = vrot.lane.b32.xlu0 %v1732, 48
        %v2138 = vpop.permute.xlu0 %2137
        %2139 = vrot.lane.b32.xlu0 %v1733, 48
        %v2140 = vpop.permute.xlu0 %2139
        %2141 = vrot.lane.b32.xlu0 %v1734, 48
        %v2142 = vpop.permute.xlu0 %2141
        %2143 = vrot.lane.b32.xlu0 %v1735, 48
        %v2144 = vpop.permute.xlu0 %2143
        %2145 = vrot.lane.b32.xlu0 %v1736, 48
        %v2146 = vpop.permute.xlu0 %2145
        %2147 = vrot.lane.b32.xlu0 %v1737, 48
        %v2148 = vpop.permute.xlu0 %2147
        %2149 = vrot.lane.b32.xlu0 %v1738, 48
        %v2150 = vpop.permute.xlu0 %2149
        %2151 = vrot.lane.b32.xlu0 %v1739, 48
        %v2152 = vpop.permute.xlu0 %2151
        %2153 = vrot.lane.b32.xlu0 %v1740, 48
        %v2154 = vpop.permute.xlu0 %2153
        %2155 = vrot.lane.b32.xlu0 %v1741, 48
        %v2156 = vpop.permute.xlu0 %2155
        %2157 = vrot.lane.b32.xlu0 %v1742, 48
        %v2158 = vpop.permute.xlu0 %2157
        %2191 = vrot.lane.b32.xlu0 %v1743, 56
        %v2192 = vpop.permute.xlu0 %2191
        %2193 = vrot.lane.b32.xlu0 %v1744, 56
        %v2194 = vpop.permute.xlu0 %2193
        %2195 = vrot.lane.b32.xlu0 %v1745, 56
        %v2196 = vpop.permute.xlu0 %2195
        %2197 = vrot.lane.b32.xlu0 %v1746, 56
        %v2198 = vpop.permute.xlu0 %2197
        %2199 = vrot.lane.b32.xlu0 %v1747, 56
        %v2200 = vpop.permute.xlu0 %2199
        %2201 = vrot.lane.b32.xlu0 %v1748, 56
        %v2202 = vpop.permute.xlu0 %2201
        %2203 = vrot.lane.b32.xlu0 %v1749, 56
        %v2204 = vpop.permute.xlu0 %2203
        %2205 = vrot.lane.b32.xlu0 %v1750, 56
        %v2206 = vpop.permute.xlu0 %2205
        %2207 = vrot.lane.b32.xlu0 %v1751, 56
        %v2208 = vpop.permute.xlu0 %2207
        %2209 = vrot.lane.b32.xlu0 %v1752, 56
        %v2210 = vpop.permute.xlu0 %2209
        %2211 = vrot.lane.b32.xlu0 %v1753, 56
        %v2212 = vpop.permute.xlu0 %2211
        %2213 = vrot.lane.b32.xlu0 %v1754, 56
        %v2214 = vpop.permute.xlu0 %2213
        %2215 = vrot.lane.b32.xlu0 %v1755, 56
        %v2216 = vpop.permute.xlu0 %2215
        %2217 = vrot.lane.b32.xlu0 %v1756, 56
        %v2218 = vpop.permute.xlu0 %2217
        %2219 = vrot.lane.b32.xlu0 %v1757, 56
        %v2220 = vpop.permute.xlu0 %2219
        %2221 = vrot.lane.b32.xlu0 %v1758, 56
        %v2222 = vpop.permute.xlu0 %2221
        %2255 = vrot.lane.b32.xlu0 %v1759, 64
        %v2256 = vpop.permute.xlu0 %2255
        %2257 = vrot.lane.b32.xlu0 %v1760, 64
        %v2258 = vpop.permute.xlu0 %2257
        %2259 = vrot.lane.b32.xlu0 %v1761, 64
        %v2260 = vpop.permute.xlu0 %2259
        %2261 = vrot.lane.b32.xlu0 %v1762, 64
        %v2262 = vpop.permute.xlu0 %2261
        %2263 = vrot.lane.b32.xlu0 %v1763, 64
        %v2264 = vpop.permute.xlu0 %2263
        %2265 = vrot.lane.b32.xlu0 %v1764, 64
        %v2266 = vpop.permute.xlu0 %2265
        %2267 = vrot.lane.b32.xlu0 %v1765, 64
        %v2268 = vpop.permute.xlu0 %2267
        %2269 = vrot.lane.b32.xlu0 %v1766, 64
        %v2270 = vpop.permute.xlu0 %2269
        %2271 = vrot.lane.b32.xlu0 %v1767, 64
        %v2272 = vpop.permute.xlu0 %2271
        %2273 = vrot.lane.b32.xlu0 %v1768, 64
        %v2274 = vpop.permute.xlu0 %2273
        %2275 = vrot.lane.b32.xlu0 %v1769, 64
        %v2276 = vpop.permute.xlu0 %2275
        %2277 = vrot.lane.b32.xlu0 %v1770, 64
        %v2278 = vpop.permute.xlu0 %2277
        %2279 = vrot.lane.b32.xlu0 %v1771, 64
        %v2280 = vpop.permute.xlu0 %2279
        %2281 = vrot.lane.b32.xlu0 %v1772, 64
        %v2282 = vpop.permute.xlu0 %2281
        %2283 = vrot.lane.b32.xlu0 %v1773, 64
        %v2284 = vpop.permute.xlu0 %2283
        %2285 = vrot.lane.b32.xlu0 %v1774, 64
        %v2286 = vpop.permute.xlu0 %2285
        %2319 = vrot.lane.b32.xlu0 %v1775, 72
        %v2320 = vpop.permute.xlu0 %2319
        %2321 = vrot.lane.b32.xlu0 %v1776, 72
        %v2322 = vpop.permute.xlu0 %2321
        %2323 = vrot.lane.b32.xlu0 %v1777, 72
        %v2324 = vpop.permute.xlu0 %2323
        %2325 = vrot.lane.b32.xlu0 %v1778, 72
        %v2326 = vpop.permute.xlu0 %2325
        %2327 = vrot.lane.b32.xlu0 %v1779, 72
        %v2328 = vpop.permute.xlu0 %2327
        %2329 = vrot.lane.b32.xlu0 %v1780, 72
        %v2330 = vpop.permute.xlu0 %2329
        %2331 = vrot.lane.b32.xlu0 %v1781, 72
        %v2332 = vpop.permute.xlu0 %2331
        %2333 = vrot.lane.b32.xlu0 %v1782, 72
        %v2334 = vpop.permute.xlu0 %2333
        %2335 = vrot.lane.b32.xlu0 %v1783, 72
        %v2336 = vpop.permute.xlu0 %2335
        %2337 = vrot.lane.b32.xlu0 %v1784, 72
        %v2338 = vpop.permute.xlu0 %2337
        %2339 = vrot.lane.b32.xlu0 %v1785, 72
        %v2340 = vpop.permute.xlu0 %2339
        %2341 = vrot.lane.b32.xlu0 %v1786, 72
        %v2342 = vpop.permute.xlu0 %2341
        %2343 = vrot.lane.b32.xlu0 %v1787, 72
        %v2344 = vpop.permute.xlu0 %2343
        %2345 = vrot.lane.b32.xlu0 %v1788, 72
        %v2346 = vpop.permute.xlu0 %2345
        %2347 = vrot.lane.b32.xlu0 %v1789, 72
        %v2348 = vpop.permute.xlu0 %2347
        %2349 = vrot.lane.b32.xlu0 %v1790, 72
        %v2350 = vpop.permute.xlu0 %2349
        %v2367 = vsel %vm1141, %v1629, %v1808
        %v2368 = vsel %vm1141, %v1630, %v1810
        %v2369 = vsel %vm1141, %v1631, %v1812
        %v2370 = vsel %vm1141, %v1632, %v1814
        %v2371 = vsel %vm1141, %v1633, %v1816
        %v2372 = vsel %vm1141, %v1634, %v1818
        %v2373 = vsel %vm1141, %v1635, %v1820
        %v2374 = vsel %vm1141, %v1636, %v1822
        %v2375 = vsel %vm1141, %v1637, %v1824
        %v2376 = vsel %vm1141, %v1638, %v1826
        %v2377 = vsel %vm1141, %v1639, %v1828
        %v2378 = vsel %vm1141, %v1640, %v1830
        %v2379 = vsel %vm1141, %v1641, %v1832
        %v2380 = vsel %vm1141, %v1642, %v1834
        %v2381 = vsel %vm1141, %v1643, %v1836
        %v2382 = vsel %vm1141, %v1644, %v1838
        %v2383 = vsel %vm1162, %v2367, %v1872
        %v2384 = vsel %vm1162, %v2368, %v1874
        %v2385 = vsel %vm1162, %v2369, %v1876
        %v2386 = vsel %vm1162, %v2370, %v1878
        %v2387 = vsel %vm1162, %v2371, %v1880
        %v2388 = vsel %vm1162, %v2372, %v1882
        %v2389 = vsel %vm1162, %v2373, %v1884
        %v2390 = vsel %vm1162, %v2374, %v1886
        %v2391 = vsel %vm1162, %v2375, %v1888
        %v2392 = vsel %vm1162, %v2376, %v1890
        %v2393 = vsel %vm1162, %v2377, %v1892
        %v2394 = vsel %vm1162, %v2378, %v1894
        %v2395 = vsel %vm1162, %v2379, %v1896
        %v2396 = vsel %vm1162, %v2380, %v1898
        %v2397 = vsel %vm1162, %v2381, %v1900
        %v2398 = vsel %vm1162, %v2382, %v1902
        %v2399 = vsel %vm1183, %v2383, %v1936
        %v2400 = vsel %vm1183, %v2384, %v1938
        %v2401 = vsel %vm1183, %v2385, %v1940
        %v2402 = vsel %vm1183, %v2386, %v1942
        %v2403 = vsel %vm1183, %v2387, %v1944
        %v2404 = vsel %vm1183, %v2388, %v1946
        %v2405 = vsel %vm1183, %v2389, %v1948
        %v2406 = vsel %vm1183, %v2390, %v1950
        %v2407 = vsel %vm1183, %v2391, %v1952
        %v2408 = vsel %vm1183, %v2392, %v1954
        %v2409 = vsel %vm1183, %v2393, %v1956
        %v2410 = vsel %vm1183, %v2394, %v1958
        %v2411 = vsel %vm1183, %v2395, %v1960
        %v2412 = vsel %vm1183, %v2396, %v1962
        %v2413 = vsel %vm1183, %v2397, %v1964
        %v2414 = vsel %vm1183, %v2398, %v1966
        %v2415 = vsel %vm1204, %v2399, %v2000
        %v2416 = vsel %vm1204, %v2400, %v2002
        %v2417 = vsel %vm1204, %v2401, %v2004
        %v2418 = vsel %vm1204, %v2402, %v2006
        %v2419 = vsel %vm1204, %v2403, %v2008
        %v2420 = vsel %vm1204, %v2404, %v2010
        %v2421 = vsel %vm1204, %v2405, %v2012
        %v2422 = vsel %vm1204, %v2406, %v2014
        %v2423 = vsel %vm1204, %v2407, %v2016
        %v2424 = vsel %vm1204, %v2408, %v2018
        %v2425 = vsel %vm1204, %v2409, %v2020
        %v2426 = vsel %vm1204, %v2410, %v2022
        %v2427 = vsel %vm1204, %v2411, %v2024
        %v2428 = vsel %vm1204, %v2412, %v2026
        %v2429 = vsel %vm1204, %v2413, %v2028
        %v2430 = vsel %vm1204, %v2414, %v2030
        %v2431 = vsel %vm1225, %v2415, %v2064
        %v2432 = vsel %vm1225, %v2416, %v2066
        %v2433 = vsel %vm1225, %v2417, %v2068
        %v2434 = vsel %vm1225, %v2418, %v2070
        %v2435 = vsel %vm1225, %v2419, %v2072
        %v2436 = vsel %vm1225, %v2420, %v2074
        %v2437 = vsel %vm1225, %v2421, %v2076
        %v2438 = vsel %vm1225, %v2422, %v2078
        %v2439 = vsel %vm1225, %v2423, %v2080
        %v2440 = vsel %vm1225, %v2424, %v2082
        %v2441 = vsel %vm1225, %v2425, %v2084
        %v2442 = vsel %vm1225, %v2426, %v2086
        %v2443 = vsel %vm1225, %v2427, %v2088
        %v2444 = vsel %vm1225, %v2428, %v2090
        %v2445 = vsel %vm1225, %v2429, %v2092
        %v2446 = vsel %vm1225, %v2430, %v2094
        %v2447 = vsel %vm1246, %v2431, %v2128
        %v2448 = vsel %vm1246, %v2432, %v2130
        %v2449 = vsel %vm1246, %v2433, %v2132
        %v2450 = vsel %vm1246, %v2434, %v2134
        %v2451 = vsel %vm1246, %v2435, %v2136
        %v2452 = vsel %vm1246, %v2436, %v2138
        %v2453 = vsel %vm1246, %v2437, %v2140
        %v2454 = vsel %vm1246, %v2438, %v2142
        %v2455 = vsel %vm1246, %v2439, %v2144
        %v2456 = vsel %vm1246, %v2440, %v2146
        %v2457 = vsel %vm1246, %v2441, %v2148
        %v2458 = vsel %vm1246, %v2442, %v2150
        %v2459 = vsel %vm1246, %v2443, %v2152
        %v2460 = vsel %vm1246, %v2444, %v2154
        %v2461 = vsel %vm1246, %v2445, %v2156
        %v2462 = vsel %vm1246, %v2446, %v2158
        %v2463 = vsel %vm1267, %v2447, %v2192
        %v2464 = vsel %vm1267, %v2448, %v2194
        %v2465 = vsel %vm1267, %v2449, %v2196
        %v2466 = vsel %vm1267, %v2450, %v2198
        %v2467 = vsel %vm1267, %v2451, %v2200
        %v2468 = vsel %vm1267, %v2452, %v2202
        %v2469 = vsel %vm1267, %v2453, %v2204
        %v2470 = vsel %vm1267, %v2454, %v2206
        %v2471 = vsel %vm1267, %v2455, %v2208
        %v2472 = vsel %vm1267, %v2456, %v2210
        %v2473 = vsel %vm1267, %v2457, %v2212
        %v2474 = vsel %vm1267, %v2458, %v2214
        %v2475 = vsel %vm1267, %v2459, %v2216
        %v2476 = vsel %vm1267, %v2460, %v2218
        %v2477 = vsel %vm1267, %v2461, %v2220
        %v2478 = vsel %vm1267, %v2462, %v2222
        %v2479 = vsel %vm1288, %v2463, %v2256
        %v2480 = vsel %vm1288, %v2464, %v2258
        %v2481 = vsel %vm1288, %v2465, %v2260
        %v2482 = vsel %vm1288, %v2466, %v2262
        %v2483 = vsel %vm1288, %v2467, %v2264
        %v2484 = vsel %vm1288, %v2468, %v2266
        %v2485 = vsel %vm1288, %v2469, %v2268
        %v2486 = vsel %vm1288, %v2470, %v2270
        %v2487 = vsel %vm1288, %v2471, %v2272
        %v2488 = vsel %vm1288, %v2472, %v2274
        %v2489 = vsel %vm1288, %v2473, %v2276
        %v2490 = vsel %vm1288, %v2474, %v2278
        %v2491 = vsel %vm1288, %v2475, %v2280
        %v2492 = vsel %vm1288, %v2476, %v2282
        %v2493 = vsel %vm1288, %v2477, %v2284
        %v2494 = vsel %vm1288, %v2478, %v2286
        %v2495 = vsel %vm1325, %v2479, %v2320
        %v2496 = vsel %vm1325, %v2480, %v2322
        %v2497 = vsel %vm1325, %v2481, %v2324
        %v2498 = vsel %vm1325, %v2482, %v2326
        %v2499 = vsel %vm1325, %v2483, %v2328
        %v2500 = vsel %vm1325, %v2484, %v2330
        %v2501 = vsel %vm1325, %v2485, %v2332
        %v2502 = vsel %vm1325, %v2486, %v2334
        %v2503 = vsel %vm1325, %v2487, %v2336
        %v2504 = vsel %vm1325, %v2488, %v2338
        %v2505 = vsel %vm1325, %v2489, %v2340
        %v2506 = vsel %vm1325, %v2490, %v2342
        %v2507 = vsel %vm1325, %v2491, %v2344
        %v2508 = vsel %vm1325, %v2492, %v2346
        %v2509 = vsel %vm1325, %v2493, %v2348
        %v2510 = vsel %vm1325, %v2494, %v2350
        %v2511 = vld [vmem:[#allocation9] sm:$0xff]
        %v2512 = vld [vmem:[#allocation9 + $0x8] sm:$0xff]
        %v2513 = vld [vmem:[#allocation9 + $0x10] sm:$0xff]
        %v2514 = vld [vmem:[#allocation9 + $0x18] sm:$0xff]
        %v2515 = vld [vmem:[#allocation9 + $0x20] sm:$0xff]
        %v2516 = vld [vmem:[#allocation9 + $0x28] sm:$0xff]
        %v2517 = vld [vmem:[#allocation9 + $0x30] sm:$0xff]
        %v2518 = vld [vmem:[#allocation9 + $0x38] sm:$0xff]
        %v2519 = vld [vmem:[#allocation9 + $0x40] sm:$0xff]
        %v2520 = vld [vmem:[#allocation9 + $0x48] sm:$0xff]
        %v2521 = vld [vmem:[#allocation11] sm:$0x1]
        %v2523 = vlaneseq
        %v2524 = vshrl.u32 %v2523, 7
        %v2525 = vsub.s32 0, %v2524
        %v2526 = vrot.slane %v2521, %v2525
        %vm2528 = vcmask 654336
        %v2530 = vsel %vm2528, %v2495, 0
        %v2533 = vsel %vm2528, %v2496, 0
        %v2536 = vsel %vm2528, %v2497, 0
        %v2539 = vsel %vm2528, %v2498, 0
        %v2542 = vsel %vm2528, %v2499, 0
        %v2545 = vsel %vm2528, %v2500, 0
        %v2548 = vsel %vm2528, %v2501, 0
        %v2551 = vsel %vm2528, %v2502, 0
        %v2554 = vsel %vm2528, %v2503, 0
        %v2557 = vsel %vm2528, %v2504, 0
        %v2560 = vsel %vm2528, %v2505, 0
        %v2563 = vsel %vm2528, %v2506, 0
        %v2566 = vsel %vm2528, %v2507, 0
        %v2569 = vsel %vm2528, %v2508, 0
        %v2572 = vsel %vm2528, %v2509, 0
        %v2575 = vsel %vm2528, %v2510, 0
        %2577 = vmatprep.subr.mxu0 0.0
        %2578 = vmatpush1.msra.mxu0 %v2511
        %2579 = vmatprep.subr.mxu0 0.0
        %2580 = vmatpush1.msra.mxu0 %v2512
        %2581 = vmatprep.subr.mxu0 0.0
        %2582 = vmatpush1.msra.mxu0 %v2513
        %2583 = vmatprep.subr.mxu0 0.0
        %2584 = vmatpush1.msra.mxu0 %v2514
        %2585 = vmatprep.subr.mxu0 0.0
        %2586 = vmatpush1.msra.mxu0 %v2515
        %2587 = vmatprep.subr.mxu0 0.0
        %2588 = vmatpush1.msra.mxu0 %v2516
        %2589 = vmatprep.subr.mxu0 0.0
        %2590 = vmatpush1.msra.mxu0 %v2517
        %2591 = vmatprep.subr.mxu0 0.0
        %2592 = vmatpush1.msra.mxu0 %v2518
        %2593 = vmatprep.subr.mxu0 0.0
        %2594 = vmatpush1.msra.mxu0 %v2519
        %2595 = vmatprep.subr.mxu0 0.0
        %2596 = vmatpush1.msra.mxu0 %v2520
        %2597 = vmatprep.subr.mxu0 0.0
        %2598 = vmatpush1.msra.mxu0 0.0
        %2599 = vmatprep.subr.mxu0 0.0
        %2600 = vmatpush1.msra.mxu0 0.0
        %2601 = vmatprep.subr.mxu0 0.0
        %2602 = vmatpush1.msra.mxu0 0.0
        %2603 = vmatprep.subr.mxu0 0.0
        %2604 = vmatpush1.msra.mxu0 0.0
        %2605 = vmatprep.subr.mxu0 0.0
        %2606 = vmatpush1.msra.mxu0 0.0
        %2607 = vmatprep.subr.mxu0 0.0
        %2608 = vmatpush1.msra.mxu0 0.0
        %2609 = vmatprep.subr.mxu0 0.0
        %2610 = vmatpush1.msra.mxu0 0.0
        %2611 = vmatprep.subr.mxu0 0.0
        %2612 = vmatpush1.msra.mxu0 0.0
        %2613 = vmatprep.subr.mxu0 0.0
        %2614 = vmatpush1.msra.mxu0 0.0
        %2615 = vmatprep.subr.mxu0 0.0
        %2616 = vmatpush1.msra.mxu0 0.0
        %2617 = vmatprep.subr.mxu0 0.0
        %2618 = vmatpush1.msra.mxu0 0.0
        %2619 = vmatprep.subr.mxu0 0.0
        %2620 = vmatpush1.msra.mxu0 0.0
        %2621 = vmatprep.subr.mxu0 0.0
        %2622 = vmatpush1.msra.mxu0 0.0
        %2623 = vmatprep.subr.mxu0 0.0
        %2624 = vmatpush1.msra.mxu0 0.0
        %2625 = vmatprep.subr.mxu0 0.0
        %2626 = vmatpush1.msra.mxu0 0.0
        %2627 = vmatprep.subr.mxu0 0.0
        %2628 = vmatpush1.msra.mxu0 0.0
        %2629 = vmatprep.subr.mxu0 0.0
        %2630 = vmatpush1.msra.mxu0 0.0
        %2631 = vmatprep.subr.mxu0 0.0
        %2632 = vmatpush1.msra.mxu0 0.0
        %2633 = vmatprep.subr.mxu0 0.0
        %2634 = vmatpush1.msra.mxu0 0.0
        %2635 = vmatprep.subr.mxu0 0.0
        %2636 = vmatpush1.msra.mxu0 0.0
        %2637 = vmatprep.subr.mxu0 0.0
        %2638 = vmatpush1.msra.mxu0 0.0
        %2639 = vmatprep.subr.mxu0 0.0
        %2640 = vmatpush1.msra.mxu0 0.0
        %2641 = vmatprep.mubr.f32.mxu0 0.0
        %2642 = vmatmul.mubr.f32.gmra.mrb[0].mxu0 %v2530
        %v2643 = vpop.f32.mrb[0].mxu0
        %v2644 = vadd.f32 %v2526, %v2643
        %v2645 = vpop.f32.mrb[0].mxu0
        %2646 = vmatprep.mubr.f32.mxu0 0.0
        %2647 = vmatmul.mubr.f32.gmra.mrb[0].mxu0 %v2533
        %v2648 = vpop.f32.mrb[0].mxu0
        %v2649 = vadd.f32 %v2526, %v2648
        %v2650 = vpop.f32.mrb[0].mxu0
        %2651 = vmatprep.mubr.f32.mxu0 0.0
        %2652 = vmatmul.mubr.f32.gmra.mrb[0].mxu0 %v2536
        %v2653 = vpop.f32.mrb[0].mxu0
        %v2654 = vadd.f32 %v2526, %v2653
        %v2655 = vpop.f32.mrb[0].mxu0
        %2656 = vmatprep.mubr.f32.mxu0 0.0
        %2657 = vmatmul.mubr.f32.gmra.mrb[0].mxu0 %v2539
        %v2658 = vpop.f32.mrb[0].mxu0
        %v2659 = vadd.f32 %v2526, %v2658
        %v2660 = vpop.f32.mrb[0].mxu0
        %2661 = vmatprep.mubr.f32.mxu0 0.0
        %2662 = vmatmul.mubr.f32.gmra.mrb[0].mxu0 %v2542
        %v2663 = vpop.f32.mrb[0].mxu0
        %v2664 = vadd.f32 %v2526, %v2663
        %v2665 = vpop.f32.mrb[0].mxu0
        %2666 = vmatprep.mubr.f32.mxu0 0.0
        %2667 = vmatmul.mubr.f32.gmra.mrb[0].mxu0 %v2545
        %v2668 = vpop.f32.mrb[0].mxu0
        %v2669 = vadd.f32 %v2526, %v2668
        %v2670 = vpop.f32.mrb[0].mxu0
        %2671 = vmatprep.mubr.f32.mxu0 0.0
        %2672 = vmatmul.mubr.f32.gmra.mrb[0].mxu0 %v2548
        %v2673 = vpop.f32.mrb[0].mxu0
        %v2674 = vadd.f32 %v2526, %v2673
        %v2675 = vpop.f32.mrb[0].mxu0
        %2676 = vmatprep.mubr.f32.mxu0 0.0
        %2677 = vmatmul.mubr.f32.gmra.mrb[0].mxu0 %v2551
        %v2678 = vpop.f32.mrb[0].mxu0
        %v2679 = vadd.f32 %v2526, %v2678
        %v2680 = vpop.f32.mrb[0].mxu0
        %2681 = vmatprep.mubr.f32.mxu0 0.0
        %2682 = vmatmul.mubr.f32.gmra.mrb[0].mxu0 %v2554
        %v2683 = vpop.f32.mrb[0].mxu0
        %v2684 = vadd.f32 %v2526, %v2683
        %v2685 = vpop.f32.mrb[0].mxu0
        %2686 = vmatprep.mubr.f32.mxu0 0.0
        %2687 = vmatmul.mubr.f32.gmra.mrb[0].mxu0 %v2557
        %v2688 = vpop.f32.mrb[0].mxu0
        %v2689 = vadd.f32 %v2526, %v2688
        %v2690 = vpop.f32.mrb[0].mxu0
        %2691 = vmatprep.mubr.f32.mxu0 0.0
        %2692 = vmatmul.mubr.f32.gmra.mrb[0].mxu0 %v2560
        %v2693 = vpop.f32.mrb[0].mxu0
        %v2694 = vadd.f32 %v2526, %v2693
        %v2695 = vpop.f32.mrb[0].mxu0
        %2696 = vmatprep.mubr.f32.mxu0 0.0
        %2697 = vmatmul.mubr.f32.gmra.mrb[0].mxu0 %v2563
        %v2698 = vpop.f32.mrb[0].mxu0
        %v2699 = vadd.f32 %v2526, %v2698
        %v2700 = vpop.f32.mrb[0].mxu0
        %2701 = vmatprep.mubr.f32.mxu0 0.0
        %2702 = vmatmul.mubr.f32.gmra.mrb[0].mxu0 %v2566
        %v2703 = vpop.f32.mrb[0].mxu0
        %v2704 = vadd.f32 %v2526, %v2703
        %v2705 = vpop.f32.mrb[0].mxu0
        %2706 = vmatprep.mubr.f32.mxu0 0.0
        %2707 = vmatmul.mubr.f32.gmra.mrb[0].mxu0 %v2569
        %v2708 = vpop.f32.mrb[0].mxu0
        %v2709 = vadd.f32 %v2526, %v2708
        %v2710 = vpop.f32.mrb[0].mxu0
        %2711 = vmatprep.mubr.f32.mxu0 0.0
        %2712 = vmatmul.mubr.f32.gmra.mrb[0].mxu0 %v2572
        %v2713 = vpop.f32.mrb[0].mxu0
        %v2714 = vadd.f32 %v2526, %v2713
        %v2715 = vpop.f32.mrb[0].mxu0
        %2716 = vmatprep.mubr.f32.mxu0 0.0
        %2717 = vmatmul.mubr.f32.gmra.mrb[0].mxu0 %v2575
        %v2718 = vpop.f32.mrb[0].mxu0
        %v2719 = vadd.f32 %v2526, %v2718
        %v2720 = vpop.f32.mrb[0].mxu0
        %2721 = vdwg.mxu0
        %v2722 = vmax.f32 %v2644, 0.0
        %v2723 = vmax.f32 %v2649, 0.0
        %v2724 = vmax.f32 %v2654, 0.0
        %v2725 = vmax.f32 %v2659, 0.0
        %v2726 = vmax.f32 %v2664, 0.0
        %v2727 = vmax.f32 %v2669, 0.0
        %v2728 = vmax.f32 %v2674, 0.0
        %v2729 = vmax.f32 %v2679, 0.0
        %v2730 = vmax.f32 %v2684, 0.0
        %v2731 = vmax.f32 %v2689, 0.0
        %v2732 = vmax.f32 %v2694, 0.0
        %v2733 = vmax.f32 %v2699, 0.0
        %v2734 = vmax.f32 %v2704, 0.0
        %v2735 = vmax.f32 %v2709, 0.0
        %v2736 = vmax.f32 %v2714, 0.0
        %v2737 = vmax.f32 %v2719, 0.0
        %2738 = vst.msk [vmem:[%s310] sm:$0xff] %vm1141, %v2722
        %2739 = vst.msk [vmem:[%s310 + $0x8] sm:$0xff] %vm1141, %v2723
        %2740 = vst.msk [vmem:[%s310 + $0x10] sm:$0xff] %vm1141, %v2724
        %2741 = vst.msk [vmem:[%s310 + $0x18] sm:$0xff] %vm1141, %v2725
        %2742 = vst.msk [vmem:[%s310 + $0x20] sm:$0xff] %vm1141, %v2726
        %2743 = vst.msk [vmem:[%s310 + $0x28] sm:$0xff] %vm1141, %v2727
        %2744 = vst.msk [vmem:[%s310 + $0x30] sm:$0xff] %vm1141, %v2728
        %2745 = vst.msk [vmem:[%s310 + $0x38] sm:$0xff] %vm1141, %v2729
        %2746 = vst.msk [vmem:[%s310 + $0x40] sm:$0xff] %vm1141, %v2730
        %2747 = vst.msk [vmem:[%s310 + $0x48] sm:$0xff] %vm1141, %v2731
        %2748 = vst.msk [vmem:[%s310 + $0x50] sm:$0xff] %vm1141, %v2732
        %2749 = vst.msk [vmem:[%s310 + $0x58] sm:$0xff] %vm1141, %v2733
        %2750 = vst.msk [vmem:[%s310 + $0x60] sm:$0xff] %vm1141, %v2734
        %2751 = vst.msk [vmem:[%s310 + $0x68] sm:$0xff] %vm1141, %v2735
        %2752 = vst.msk [vmem:[%s310 + $0x70] sm:$0xff] %vm1141, %v2736
        %2753 = vst.msk [vmem:[%s310 + $0x78] sm:$0xff] %vm1141, %v2737
        %s2754 = sand.u32 %s156, 1
        %s2755 = scalar_lea.sflag [#allocation5], %s2754
        %s2756 = sand.u32 %s156, 1
        %s2757 = smul.addr %s2756, 128
        %s2758 = scalar_lea.vmem [#allocation12], %s2757
        // Predicated region
        $region69: #{basic_block_forward.1} parent=39 // pred_check
          %p2759 = pneg %p166
        $region70: #{basic_block_forward.1} parent=39 // pred_check_branch
          %2761 = sbr.rel (%p2759) target = $region72
        $region71: #{basic_block_forward.1} parent=39 // pred_region
          %s2762 = smul.u32 8, %s29
          %s2764 = ssub.s32 2048, 2048
          %2765 = vsyncadd %s2755, %s2764
          %s2766 = smul.addr %s2762, 2
          %s2767 = smul.addr %s28, 32
          %s2768 = sadd.s32 %s2766, %s2767
          %s2769 = smul.addr %s2768, 128
          %s2770 = scalar_lea.hbm %s5, %s2769
          %s2771 = sshll.u32 %s2758, 4
          %s2772 = int_to_ptr.vmem [resolvable:$true] %s2771
          %2777 = dma.vmem_to_hbm [thread:$0]  %s2772, 2048, %s2770, %s2755, 128, 128, 8
        $region72: #{basic_block_forward.1} parent=39 // pred_fallthru
          _
      $region40: #{basic_block_forward.1} parent=5 // pred_fallthru
        _
      %p2778 = scmp.le.s32.totalorder 2, %s19
      // Predicated region
      $region73: #{basic_block_forward.1} parent=5 // pred_check
        %p2779 = pneg %p2778
      $region74: #{basic_block_forward.1} parent=5 // pred_check_branch
        %2781 = sbr.rel (%p2779) target = $region76
      $region75: #{basic_block_forward.1} parent=5 // pred_region
        %s2782 = ssub.s32 %s19, 2
        // Predicated region
        $region77: #{basic_block_forward.1} parent=75 // pred_check
          %p2783 = pneg %p172
        $region78: #{basic_block_forward.1} parent=75 // pred_check_branch
          %2785 = sbr.rel (%p2783) target = $region80
        $region79: #{basic_block_forward.1} parent=75 // pred_region
          %s2786 = sand.u32 %s157, 1
          %s2787 = scalar_lea.sflag [#allocation5], %s2786
          %s2788 = sand.u32 %s157, 1
          %s2789 = smul.addr %s2788, 128
          %s2790 = scalar_lea.vmem [#allocation12], %s2789
          %2791 = dma.done %s2787, 2048
        $region80: #{basic_block_forward.1} parent=75 // pred_fallthru
          _
      $region76: #{basic_block_forward.1} parent=5 // pred_fallthru
        _
    $region6: #{basic_block_forward.1} parent=1 // loop_footer
      %s23 = sadd.s32 1, %s19
    $region7: #{basic_block_forward.1} parent=1 // loop_footer_branch
      %18 = sbr.rel target = $region3
    $region8: #{basic_block_forward.1} parent=1 // loop_exit
      _
    %2792 = vsyncpa [#allocation4], 1
    %s2793 = scalar_lea.sflag [#allocation4], 1
    %2794 = vsyncpa %s2793, 1
    %2795 = vsyncpa [#allocation7], 1
    %2796 = vsyncpa [#allocation10], 1
    %2797 = vsyncpa [#allocation5], 1
    %s2798 = scalar_lea.sflag [#allocation5], 1
    %2799 = vsyncpa %s2798, 1

</llo_original>
